<compile_context>
chip_gen: v5e
topology: v5e:2x2
jax: 0.10.0
libtpu: 0.0.40
codegen_flags: <defaults>
</compile_context>

<pallas_src>
import functools

import jax
import jax.numpy as jnp
from jax.experimental import pallas as pl
from jax.experimental.pallas import tpu as pltpu

NEG_SLOPE = 0.1   # LeakyReLU negative slope used by this WRN implementation
BN_EPS = 1e-5


def _leaky(x):
    return jnp.where(x > 0.0, x, NEG_SLOPE * x)


def _itemsize(dt):
    return jnp.dtype(dt).itemsize


# ----------------------------------------------------------------------------
# Fused conv kernel: one (tile_m, K) @ (K, Cout) matmul per grid step with an
# optional bias+LeakyReLU epilogue (BN scale pre-folded into the weights), an
# optional fused 1x1-shortcut second matmul sharing the same X tile, and an
# optional residual add.  `reshape_to` switches on the lane-dense store layout.
# ----------------------------------------------------------------------------
def _conv_kernel(*refs, has_post, has_res, has_sc, reshape_to):
    n_out = 2 if has_sc else 1
    out_refs = refs[len(refs) - n_out:]
    ins = list(refs[:len(refs) - n_out])
    x_ref = ins.pop(0)                                # (tm, K)
    w_ref = ins.pop(0)                                # (K, tn)  scale folded in
    b_ref = ins.pop(0) if has_post else None          # (1, tn)  f32
    sc_ref = ins.pop(0) if has_sc else None           # (K, tn)  zero-padded 1x1
    r_ref = ins.pop(0) if has_res else None           # residual block

    x = x_ref[...]
    acc = jnp.dot(x, w_ref[...], preferred_element_type=jnp.float32)
    if has_post:
        acc = acc + b_ref[...]
        acc = jnp.where(acc > 0.0, acc, NEG_SLOPE * acc)
    if reshape_to is not None:
        acc = acc.reshape(reshape_to)                 # lane-dense (r, Wo*Cout)
    if has_res:
        acc = acc + r_ref[...].astype(jnp.float32)
    out_refs[0][...] = acc.astype(out_refs[0].dtype)
    if has_sc:
        acc2 = jnp.dot(x, sc_ref[...], preferred_element_type=jnp.float32)
        if reshape_to is not None:
            acc2 = acc2.reshape(reshape_to)
        out_refs[1][...] = acc2.astype(out_refs[1].dtype)


# ----------------------------------------------------------------------------
# im2col (built in the compute dtype so the materialized matrix is bf16 when
# bf16 operands are used; bn1 + padding + tap gather fuse into this producer).
# ----------------------------------------------------------------------------
def _im2col(x, KH, KW, stride, compute_dtype):
    N, H, W, Cin = x.shape
    ph, pw = KH // 2, KW // 2
    Ho = (H + 2 * ph - KH) // stride + 1
    Wo = (W + 2 * pw - KW) // stride + 1
    xp = jnp.pad(x.astype(compute_dtype), ((0, 0), (ph, ph), (pw, pw), (0, 0)))
    cols = []
    for ky in range(KH):
        for kx in range(KW):
            sl = xp[:, ky:ky + stride * (Ho - 1) + 1:stride,
                       kx:kx + stride * (Wo - 1) + 1:stride, :]
            cols.append(sl.reshape(N * Ho * Wo, Cin))
    return jnp.concatenate(cols, axis=1), Ho, Wo


# ----------------------------------------------------------------------------
# Generation-aware VMEM sizing
# ----------------------------------------------------------------------------
def _vmem_limit_bytes():
    cap = 128 * 1024 * 1024
    try:
        cap = int(pltpu.get_tpu_info().vmem_capacity_bytes)
    except Exception:
        pass
    if cap <= 64 * 1024 * 1024:       # v7x-class: 64 MiB VMEM per TensorCore
        return 32 * 1024 * 1024
    return 96 * 1024 * 1024           # v5e / v6e: 128 MiB


# One-time probe: does the lane-dense (tm, Cout)->(r, Wo*Cout) in-kernel
# reshape lower on this Mosaic build?  If not, every conv uses the general
# layout (which always works) so the script still runs correctly.
_LANE_DENSE_OK = None


def _lane_dense_supported():
    global _LANE_DENSE_OK
    if _LANE_DENSE_OK is None:
        try:
            with jax.ensure_compile_time_eval():
                rt, wo, cout, k = 16, 8, 16, 32
                x = jnp.zeros((rt * wo, k), jnp.bfloat16)
                w = jnp.zeros((k, cout), jnp.bfloat16)
                b = jnp.zeros((1, cout), jnp.float32)
                out = pl.pallas_call(
                    functools.partial(_conv_kernel, has_post=True,
                                      has_res=False, has_sc=False,
                                      reshape_to=(rt, wo * cout)),
                    out_shape=jax.ShapeDtypeStruct((rt, wo * cout),
                                                   jnp.bfloat16),
                    grid=(1,),
                    in_specs=[pl.BlockSpec((rt * wo, k), lambda i: (0, 0)),
                              pl.BlockSpec((k, cout), lambda i: (0, 0)),
                              pl.BlockSpec((1, cout), lambda i: (0, 0))],
                    out_specs=pl.BlockSpec((rt, wo * cout), lambda i: (0, 0)),
                )(x, w, b)
                jax.block_until_ready(out)
            _LANE_DENSE_OK = True
        except Exception:
            _LANE_DENSE_OK = False
    return _LANE_DENSE_OK


# ----------------------------------------------------------------------------
# Tile sizing
# ----------------------------------------------------------------------------
def _pick_row_tile(rows, wo, k, cout, n_out, has_res, isize, osize, rsize,
                   budget):
    """Pick a lane-dense row tile (rows of N*Ho). 0 => use the general path."""
    per_row = (2 * wo * k * isize                       # double-buffered X
               + 2 * wo * cout * osize * n_out          # double-buffered out(s)
               + (2 * wo * cout * rsize if has_res else 0)
               + wo * cout * 4 * n_out)                 # f32 acc slack
    fixed = k * cout * isize * n_out + 8 * cout
    r_cap = max(1, (budget - fixed) // max(per_row, 1))
    r_cap = min(r_cap, max(1, 2048 // max(wo, 1)))      # cap matmul M tile
    sub = 16 if (isize == 2 or osize == 2 or rsize == 2) else 8
    cap2 = rows // 2 if rows >= 2 * sub else rows        # prefer >=2 tiles (v7x)
    cap = min(r_cap, cap2)
    best, d = 0, sub
    while d <= cap:
        if rows % d == 0:
            best = d
        d += sub
    if best:
        return best
    if rows <= r_cap:
        return rows           # single full tile; full-dim blocks are legal
    return 0


def _pick_mn_tiles(M, K, cout, n_out, has_res, isize, osize, rsize, budget):
    tn = cout
    if cout > 256:                      # wide WRN-28-10 layers: tile Cout
        for cand in (256, 128):
            if cout % cand == 0:
                tn = cand
                break
    sub = 16 if (isize == 2 or osize == 2 or rsize == 2) else 8
    per_m = (2 * K * isize + 2 * tn * osize * n_out
             + (2 * tn * rsize if has_res else 0) + tn * 4 * n_out)
    fixed = 2 * K * tn * isize * n_out + 16 * tn
    tm_cap = max(sub, (budget - fixed) // max(per_m, 1))
    tm = min(2048, tm_cap, ((M + sub - 1) // sub) * sub)
    tm = max(sub, (tm // sub) * sub)
    return tm, tn


# ----------------------------------------------------------------------------
# Conv wrapper around pallas_call
# ----------------------------------------------------------------------------
def conv2d_fused(x, w, stride, *, post_scale=None, post_bias=None,
                 shortcut_w=None, residual=None,
                 compute_dtype=jnp.bfloat16, out_dtype=None):
    """Conv (no bias) as one fused Pallas matmul per tile.

    Optional fusions: folded-BN (scale folded into weight columns) + LeakyReLU
    epilogue; a 1x1/stride shortcut conv sharing the same input tile (returned
    as a second output); a residual add.
    """
    if out_dtype is None:
        out_dtype = compute_dtype
    N, H, W, Cin = x.shape
    KH, KW, _, Cout = w.shape

    X, Ho, Wo = _im2col(x, KH, KW, stride, compute_dtype)
    M, K = X.shape
    rows = N * Ho

    has_post = post_scale is not None
    has_sc = shortcut_w is not None
    has_res = residual is not None
    n_out = 2 if has_sc else 1

    # Fold BN scale into the conv weight columns (epilogue = bias + leaky).
    Wm = w.reshape(K, Cout).astype(jnp.float32)
    if has_post:
        Wm = Wm * post_scale.reshape(1, Cout).astype(jnp.float32)
    args = [X, Wm.astype(compute_dtype)]
    if has_post:
        args.append(post_bias.reshape(1, Cout).astype(jnp.float32))
    if has_sc:
        # Embed the 1x1/stride shortcut at the centre tap of the patch axis so
        # it shares X (halves activation reads) and this pallas_call.
        ctr = (KH // 2) * KW + (KW // 2)
        Wsc = jnp.zeros((K, Cout), jnp.float32)
        Wsc = Wsc.at[ctr * Cin:(ctr + 1) * Cin, :].set(
            shortcut_w.reshape(Cin, Cout).astype(jnp.float32))
        args.append(Wsc.astype(compute_dtype))

    isize = _itemsize(compute_dtype)
    osize = _itemsize(out_dtype)
    rsize = _itemsize(residual.dtype) if has_res else 4
    vmem_limit = _vmem_limit_bytes()
    budget = int(vmem_limit * 0.55)

    lane_cols = Wo * Cout
    use_lane_dense = (Cout < 128 and lane_cols % 128 == 0
                      and _lane_dense_supported())
    rt = (_pick_row_tile(rows, Wo, K, Cout, n_out, has_res, isize, osize,
                         rsize, budget) if use_lane_dense else 0)

    if rt > 0:
        # Lane-dense path: out tile (rt, Wo*Cout) -> full-width HBM stores.
        tm = rt * Wo
        grid = (rows // rt,)
        in_specs = [pl.BlockSpec((tm, K), lambda i: (i, 0)),
                    pl.BlockSpec((K, Cout), lambda i: (0, 0))]
        if has_post:
            in_specs.append(pl.BlockSpec((1, Cout), lambda i: (0, 0)))
        if has_sc:
            in_specs.append(pl.BlockSpec((K, Cout), lambda i: (0, 0)))
        if has_res:
            args.append(residual.reshape(rows, lane_cols))
            in_specs.append(pl.BlockSpec((rt, lane_cols), lambda i: (i, 0)))
        out_spec = pl.BlockSpec((rt, lane_cols), lambda i: (i, 0))
        out_shape = jax.ShapeDtypeStruct((rows, lane_cols), out_dtype)
        reshape_to = (rt, lane_cols)
        dims = ("parallel",)
        Mp = M
    else:
        # General path: (M, Cout) layout, optional Cout tiling, M padding.
        tm, tn = _pick_mn_tiles(M, K, Cout, n_out, has_res, isize, osize,
                                rsize, budget)
        Mp = ((M + tm - 1) // tm) * tm
        if Mp != M:
            args[0] = jnp.pad(X, ((0, Mp - M), (0, 0)))
        grid = (Mp // tm, Cout // tn)
        in_specs = [pl.BlockSpec((tm, K), lambda i, j: (i, 0)),
                    pl.BlockSpec((K, tn), lambda i, j: (0, j))]
        if has_post:
            in_specs.append(pl.BlockSpec((1, tn), lambda i, j: (0, j)))
        if has_sc:
            in_specs.append(pl.BlockSpec((K, tn), lambda i, j: (0, j)))
        if has_res:
            rr = residual.reshape(M, Cout)
            if Mp != M:
                rr = jnp.pad(rr, ((0, Mp - M), (0, 0)))
            args.append(rr)
            in_specs.append(pl.BlockSpec((tm, tn), lambda i, j: (i, j)))
        out_spec = pl.BlockSpec((tm, tn), lambda i, j: (i, j))
        out_shape = jax.ShapeDtypeStruct((Mp, Cout), out_dtype)
        reshape_to = None
        dims = ("parallel", "parallel")

    out = pl.pallas_call(
        functools.partial(_conv_kernel, has_post=has_post, has_res=has_res,
                          has_sc=has_sc, reshape_to=reshape_to),
        out_shape=(out_shape,) * n_out if has_sc else out_shape,
        grid=grid,
        in_specs=in_specs,
        out_specs=(out_spec,) * n_out if has_sc else out_spec,
        compiler_params=pltpu.CompilerParams(
            dimension_semantics=dims, vmem_limit_bytes=vmem_limit),
    )(*args)

    def to_nhwc(o):
        if reshape_to is not None:
            return o.reshape(N, Ho, Wo, Cout)
        return o[:M].reshape(N, Ho, Wo, Cout)

    if has_sc:
        return to_nhwc(out[0]), to_nhwc(out[1])
    return to_nhwc(out)


# ----------------------------------------------------------------------------
# BasicBlock / NetworkBlock forward (matches the PyTorch control flow exactly)
# ----------------------------------------------------------------------------
def basic_block_forward(x, p, stride, activate_before_residual, compute_dtype,
                        out_dtype):
    c_in = x.shape[-1]
    c_out = p["conv1_w"].shape[-1]
    equal = (c_in == c_out)

    def bn1_act(v):   # folded BN1 + LeakyReLU in f32; XLA fuses into im2col
        return _leaky(v.astype(jnp.float32) * p["bn1_scale"] + p["bn1_bias"])

    if (not equal) and activate_before_residual:
        x = bn1_act(x)            # shortcut also sees the activation
        conv1_in = x
    elif equal:
        conv1_in = bn1_act(x)     # residual stays the raw x
    else:
        # PyTorch quirk: relu1(bn1(x)) goes into an unused temp when
        # (not equal) and (not activate_before_residual); conv1 gets raw x.
        conv1_in = x

    if equal:
        out = conv2d_fused(conv1_in, p["conv1_w"], stride,
                           post_scale=p["bn2_scale"], post_bias=p["bn2_bias"],
                           compute_dtype=compute_dtype)
        res = x
    else:
        # conv1 (3x3) and the 1x1 shortcut share the same input in both ABR
        # branches -> fused into one pallas_call over a shared X tile.
        out, res = conv2d_fused(conv1_in, p["conv1_w"], stride,
                                post_scale=p["bn2_scale"],
                                post_bias=p["bn2_bias"],
                                shortcut_w=p["shortcut_w"],
                                compute_dtype=compute_dtype)
    # dropRate == 0.0 -> dropout is identity.
    return conv2d_fused(out, p["conv2_w"], 1, residual=res,
                        compute_dtype=compute_dtype, out_dtype=out_dtype)


def network_block_forward(x_nhwc, params_list, stride, activate_before_residual,
                          compute_dtype=jnp.bfloat16, out_dtype=jnp.float32):
    out = x_nhwc
    n = len(params_list)
    for i, p in enumerate(params_list):
        s = stride if i == 0 else 1
        odt = out_dtype if i == n - 1 else compute_dtype
        out = basic_block_forward(out, p, s, activate_before_residual,
                                  compute_dtype, odt)
    return out


# ----------------------------------------------------------------------------
# Deterministic parameter init (shapes follow BasicBlock.__init__)
# ----------------------------------------------------------------------------
def init_basic_block_params(key, c_in, c_out):
    ks = jax.random.split(key, 5)

    def bn_params(k, c):
        k1, k2, k3, k4 = jax.random.split(k, 4)
        gamma = 1.0 + 0.1 * jax.random.normal(k1, (c,), jnp.float32)
        beta = 0.1 * jax.random.normal(k2, (c,), jnp.float32)
        r_mean = 0.1 * jax.random.normal(k3, (c,), jnp.float32)
        r_var = jax.random.uniform(k4, (c,), jnp.float32, 0.5, 1.5)
        scale = gamma / jnp.sqrt(r_var + BN_EPS)
        bias = beta - r_mean * scale
        return scale, bias

    def conv_w(k, kh, kw, ci, co):
        n = kh * kw * co   # He init, as in the WRN reference code
        return jax.random.normal(k, (kh, kw, ci, co), jnp.float32) * jnp.sqrt(2.0 / n)

    s1, b1 = bn_params(ks[0], c_in)
    s2, b2 = bn_params(ks[1], c_out)
    params = {
        "bn1_scale": s1, "bn1_bias": b1,
        "conv1_w": conv_w(ks[2], 3, 3, c_in, c_out),
        "bn2_scale": s2, "bn2_bias": b2,
        "conv2_w": conv_w(ks[3], 3, 3, c_out, c_out),
    }
    if c_in != c_out:
        params["shortcut_w"] = conv_w(ks[4], 1, 1, c_in, c_out)
    return params


# ----------------------------------------------------------------------------
# Pure-JAX reference (for correctness check)
# ----------------------------------------------------------------------------
def _conv_ref(x, w, stride):
    kh, kw = w.shape[0], w.shape[1]
    return jax.lax.conv_general_dilated(
        x, w, (stride, stride),
        padding=[(kh // 2, kh // 2), (kw // 2, kw // 2)],
        dimension_numbers=("NHWC", "HWIO", "NHWC"),
        precision=jax.lax.Precision.HIGHEST)


def _basic_block_ref(x, p, stride, abr):
    c_in = x.shape[-1]
    c_out = p["conv1_w"].shape[-1]
    equal = c_in == c_out
    if (not equal) and abr:
        x = _leaky(x * p["bn1_scale"] + p["bn1_bias"])
        c1in = x
    elif equal:
        c1in = _leaky(x * p["bn1_scale"] + p["bn1_bias"])
    else:
        c1in = x
    out = _conv_ref(c1in, p["conv1_w"], stride)
    out = _leaky(out * p["bn2_scale"] + p["bn2_bias"])
    res = x if equal else _conv_ref(x, p["shortcut_w"], stride)
    return res + _conv_ref(out, p["conv2_w"], 1)


# ----------------------------------------------------------------------------
if __name__ == "__main__":
    _lane_dense_supported()   # probe once, eagerly, outside any jit trace

    key = jax.random.PRNGKey(0)
    kx, kp, kx2, kp2 = jax.random.split(key, 4)

    # Config A — NetworkBlock(nb_layers=2, in_planes=8, out_planes=16,
    #                         stride=2, dropRate=0.0, activate_before_residual=True)
    N, C_IN, C_OUT, H, W = 2, 8, 16, 16, 16
    NB_LAYERS, STRIDE, ABR = 2, 2, True

    x_nchw = jax.random.normal(kx, (N, C_IN, H, W), jnp.float32)   # PyTorch NCHW
    x_nhwc = jnp.transpose(x_nchw, (0, 2, 3, 1))                   # kernel layout

    layer_keys = jax.random.split(kp, NB_LAYERS)
    params = [init_basic_block_params(layer_keys[i],
                                      C_IN if i == 0 else C_OUT, C_OUT)
              for i in range(NB_LAYERS)]

    ref = x_nhwc
    for i, p in enumerate(params):
        ref = _basic_block_ref(ref, p, STRIDE if i == 0 else 1, ABR)
    scale = max(1.0, float(jnp.max(jnp.abs(ref))))

    # f32 operands: tight correctness check.
    fwd_f32 = jax.jit(functools.partial(
        network_block_forward, stride=STRIDE, activate_before_residual=ABR,
        compute_dtype=jnp.float32))
    out_f32 = jax.block_until_ready(fwd_f32(x_nhwc, params))
    assert out_f32.shape == (N, H // STRIDE, W // STRIDE, C_OUT), out_f32.shape
    err_f32 = float(jnp.max(jnp.abs(out_f32 - ref)))
    assert err_f32 < 1e-3 * scale, f"f32 mismatch vs reference: {err_f32}"

    # bf16 operands / f32 accumulate, bf16 intermediates (default fast path).
    fwd_bf16 = jax.jit(functools.partial(
        network_block_forward, stride=STRIDE, activate_before_residual=ABR,
        compute_dtype=jnp.bfloat16))
    out_bf16 = jax.block_until_ready(fwd_bf16(x_nhwc, params))
    err_bf16 = float(jnp.max(jnp.abs(out_bf16.astype(jnp.float32) - ref)))
    assert err_bf16 < 0.1 * scale, f"bf16 mismatch vs reference: {err_bf16}"

    # Config B — exercises the general (non-lane-dense) layout and the
    # ABR=False downsampling quirk (conv1 sees raw x, shortcut fused).
    N2, C_IN2, C_OUT2, H2 = 2, 8, 24, 12
    x2 = jax.random.normal(kx2, (N2, H2, H2, C_IN2), jnp.float32)
    p2 = [init_basic_block_params(kp2, C_IN2, C_OUT2)]
    ref2 = _basic_block_ref(x2, p2[0], 2, False)
    fwd2 = jax.jit(functools.partial(
        network_block_forward, stride=2, activate_before_residual=False,
        compute_dtype=jnp.float32))
    out2 = jax.block_until_ready(fwd2(x2, p2))
    scale2 = max(1.0, float(jnp.max(jnp.abs(ref2))))
    err2 = float(jnp.max(jnp.abs(out2 - ref2)))
    assert err2 < 1e-3 * scale2, f"config-B mismatch vs reference: {err2}"

    print("KERNEL_OK")
</pallas_src>

<mosaic_0001>
module attributes {stable_mosaic.version = 11 : i64} {
  func.func @_conv_kernel(%arg0: i32, %arg1: memref<128x32xbf16, #tpu.memory_space<vmem>>, %arg2: memref<32x16xbf16, #tpu.memory_space<vmem>>, %arg3: memref<1x16xf32, #tpu.memory_space<vmem>>, %arg4: memref<16x128xbf16, #tpu.memory_space<vmem>>) attributes {dimension_semantics = [#tpu.dimension_semantics<arbitrary>], iteration_bounds = array<i64: 1>, scalar_prefetch = 0 : i64, scratch_operands = 0 : i64, tpu.core_type = #tpu.core_type<tc>, window_params = [{pipeline_mode = #tpu.pipeline_mode<synchronous>, transform_indices = @transform_0, window_bounds = array<i64: 128, 32>}, {pipeline_mode = #tpu.pipeline_mode<synchronous>, transform_indices = @transform_1, window_bounds = array<i64: 32, 16>}, {pipeline_mode = #tpu.pipeline_mode<synchronous>, transform_indices = @transform_2, window_bounds = array<i64: 1, 16>}, {pipeline_mode = #tpu.pipeline_mode<synchronous>, transform_indices = @transform_3, window_bounds = array<i64: 16, 128>}]} {
    %c0 = arith.constant 0 : index
    %c0_0 = arith.constant 0 : index
    %0 = vector.load %arg1[%c0, %c0_0] : memref<128x32xbf16, #tpu.memory_space<vmem>>, vector<128x32xbf16>
    %c0_1 = arith.constant 0 : index
    %c0_2 = arith.constant 0 : index
    %1 = vector.load %arg2[%c0_1, %c0_2] : memref<32x16xbf16, #tpu.memory_space<vmem>>, vector<32x16xbf16>
    %cst = arith.constant dense<0.000000e+00> : vector<128x16xf32>
    %2 = tpu.matmul %0, %1, %cst {dimension_numbers = #tpu.dot_dimension_numbers<[1], [0], [0], [1], [0, 0, 1, 1], [], []>} : vector<128x32xbf16>, vector<32x16xbf16>, vector<128x16xf32> -> vector<128x16xf32>
    %c0_3 = arith.constant 0 : index
    %c0_4 = arith.constant 0 : index
    %3 = vector.load %arg3[%c0_3, %c0_4] : memref<1x16xf32, #tpu.memory_space<vmem>>, vector<1x16xf32>
    %4 = vector.broadcast %3 : vector<1x16xf32> to vector<128x16xf32>
    %5 = arith.addf %2, %4 : vector<128x16xf32>
    %cst_5 = arith.constant 0.000000e+00 : f32
    %6 = vector.broadcast %cst_5 : f32 to vector<128x16xf32>
    %7 = arith.cmpf ogt, %5, %6 : vector<128x16xf32>
    %cst_6 = arith.constant 1.000000e-01 : f32
    %8 = vector.broadcast %cst_6 : f32 to vector<128x16xf32>
    %9 = arith.mulf %8, %5 : vector<128x16xf32>
    %10 = arith.select %7, %5, %9 : vector<128x16xi1>, vector<128x16xf32>
    %11 = vector.shape_cast %10 : vector<128x16xf32> to vector<16x128xf32>
    %12 = arith.truncf %11 : vector<16x128xf32> to vector<16x128xbf16>
    %c0_7 = arith.constant 0 : index
    %c0_8 = arith.constant 0 : index
    %13 = vector.load %arg4[%c0_7, %c0_8] : memref<16x128xbf16, #tpu.memory_space<vmem>>, vector<16x128xbf16>
    tpu.vector_store %arg4[%c0_7, %c0_8], %12 {strides = array<i32>} : memref<16x128xbf16, #tpu.memory_space<vmem>>, vector<16x128xbf16>,
    return
  }
  func.func @transform_0(%arg0: i32) -> (i32, i32) {
    %c0_i32 = arith.constant 0 : i32
    %c0_i32_0 = arith.constant 0 : i32
    %c0_i32_1 = arith.constant 0 : i32
    return %c0_i32, %c0_i32_0 : i32, i32
  }
  func.func @transform_1(%arg0: i32) -> (i32, i32) {
    %c0_i32 = arith.constant 0 : i32
    %c0_i32_0 = arith.constant 0 : i32
    %c0_i32_1 = arith.constant 0 : i32
    return %c0_i32, %c0_i32_0 : i32, i32
  }
  func.func @transform_2(%arg0: i32) -> (i32, i32) {
    %c0_i32 = arith.constant 0 : i32
    %c0_i32_0 = arith.constant 0 : i32
    %c0_i32_1 = arith.constant 0 : i32
    return %c0_i32, %c0_i32_0 : i32, i32
  }
  func.func @transform_3(%arg0: i32) -> (i32, i32) {
    %c0_i32 = arith.constant 0 : i32
    %c0_i32_0 = arith.constant 0 : i32
    %c0_i32_1 = arith.constant 0 : i32
    return %c0_i32, %c0_i32_0 : i32, i32
  }
}

module attributes {stable_mosaic.version = 11 : i64} {
  func.func @_conv_kernel(%arg0: i32, %arg1: i32, %arg2: memref<128x72xf32, #tpu.memory_space<vmem>>, %arg3: memref<72x16xf32, #tpu.memory_space<vmem>>, %arg4: memref<1x16xf32, #tpu.memory_space<vmem>>, %arg5: memref<72x16xf32, #tpu.memory_space<vmem>>, %arg6: memref<128x16xf32, #tpu.memory_space<vmem>>, %arg7: memref<128x16xf32, #tpu.memory_space<vmem>>) attributes {dimension_semantics = [#tpu.dimension_semantics<parallel>, #tpu.dimension_semantics<parallel>], iteration_bounds = array<i64: 1, 1>, scalar_prefetch = 0 : i64, scratch_operands = 0 : i64, tpu.core_type = #tpu.core_type<tc>, window_params = [{transform_indices = @transform_0, window_bounds = array<i64: 128, 72>}, {transform_indices = @transform_1, window_bounds = array<i64: 72, 16>}, {transform_indices = @transform_2, window_bounds = array<i64: 1, 16>}, {transform_indices = @transform_3, window_bounds = array<i64: 72, 16>}, {transform_indices = @transform_4, window_bounds = array<i64: 128, 16>}, {transform_indices = @transform_5, window_bounds = array<i64: 128, 16>}]} {
    %c0 = arith.constant 0 : index
    %c0_0 = arith.constant 0 : index
    %0 = vector.load %arg2[%c0, %c0_0] : memref<128x72xf32, #tpu.memory_space<vmem>>, vector<128x72xf32>
    %c0_1 = arith.constant 0 : index
    %c0_2 = arith.constant 0 : index
    %1 = vector.load %arg3[%c0_1, %c0_2] : memref<72x16xf32, #tpu.memory_space<vmem>>, vector<72x16xf32>
    %cst = arith.constant dense<0.000000e+00> : vector<128x16xf32>
    %2 = tpu.matmul %0, %1, %cst {dimension_numbers = #tpu.dot_dimension_numbers<[1], [0], [0], [1], [0, 0, 1, 1], [], []>} : vector<128x72xf32>, vector<72x16xf32>, vector<128x16xf32> -> vector<128x16xf32>
    %c0_3 = arith.constant 0 : index
    %c0_4 = arith.constant 0 : index
    %3 = vector.load %arg4[%c0_3, %c0_4] : memref<1x16xf32, #tpu.memory_space<vmem>>, vector<1x16xf32>
    %4 = vector.broadcast %3 : vector<1x16xf32> to vector<128x16xf32>
    %5 = arith.addf %2, %4 : vector<128x16xf32>
    %cst_5 = arith.constant 0.000000e+00 : f32
    %6 = vector.broadcast %cst_5 : f32 to vector<128x16xf32>
    %7 = arith.cmpf ogt, %5, %6 : vector<128x16xf32>
    %cst_6 = arith.constant 1.000000e-01 : f32
    %8 = vector.broadcast %cst_6 : f32 to vector<128x16xf32>
    %9 = arith.mulf %8, %5 : vector<128x16xf32>
    %10 = arith.select %7, %5, %9 : vector<128x16xi1>, vector<128x16xf32>
    %c0_7 = arith.constant 0 : index
    %c0_8 = arith.constant 0 : index
    %11 = vector.load %arg6[%c0_7, %c0_8] : memref<128x16xf32, #tpu.memory_space<vmem>>, vector<128x16xf32>
    tpu.vector_store %arg6[%c0_7, %c0_8], %10 {strides = array<i32>} : memref<128x16xf32, #tpu.memory_space<vmem>>, vector<128x16xf32>,
    %c0_9 = arith.constant 0 : index
    %c0_10 = arith.constant 0 : index
    %12 = vector.load %arg5[%c0_9, %c0_10] : memref<72x16xf32, #tpu.memory_space<vmem>>, vector<72x16xf32>
    %cst_11 = arith.constant dense<0.000000e+00> : vector<128x16xf32>
    %13 = tpu.matmul %0, %12, %cst_11 {dimension_numbers = #tpu.dot_dimension_numbers<[1], [0], [0], [1], [0, 0, 1, 1], [], []>} : vector<128x72xf32>, vector<72x16xf32>, vector<128x16xf32> -> vector<128x16xf32>
    %c0_12 = arith.constant 0 : index
    %c0_13 = arith.constant 0 : index
    %14 = vector.load %arg7[%c0_12, %c0_13] : memref<128x16xf32, #tpu.memory_space<vmem>>, vector<128x16xf32>
    tpu.vector_store %arg7[%c0_12, %c0_13], %13 {strides = array<i32>} : memref<128x16xf32, #tpu.memory_space<vmem>>, vector<128x16xf32>,
    return
  }
  func.func @transform_0(%arg0: i32, %arg1: i32) -> (i32, i32) {
    %c0_i32 = arith.constant 0 : i32
    %c0_i32_0 = arith.constant 0 : i32
    return %arg0, %c0_i32 : i32, i32
  }
  func.func @transform_1(%arg0: i32, %arg1: i32) -> (i32, i32) {
    %c0_i32 = arith.constant 0 : i32
    %c0_i32_0 = arith.constant 0 : i32
    return %c0_i32, %arg1 : i32, i32
  }
  func.func @transform_2(%arg0: i32, %arg1: i32) -> (i32, i32) {
    %c0_i32 = arith.constant 0 : i32
    %c0_i32_0 = arith.constant 0 : i32
    return %c0_i32, %arg1 : i32, i32
  }
  func.func @transform_3(%arg0: i32, %arg1: i32) -> (i32, i32) {
    %c0_i32 = arith.constant 0 : i32
    %c0_i32_0 = arith.constant 0 : i32
    return %c0_i32, %arg1 : i32, i32
  }
  func.func @transform_4(%arg0: i32, %arg1: i32) -> (i32, i32) {
    %c0_i32 = arith.constant 0 : i32
    return %arg0, %arg1 : i32, i32
  }
  func.func @transform_5(%arg0: i32, %arg1: i32) -> (i32, i32) {
    %c0_i32 = arith.constant 0 : i32
    return %arg0, %arg1 : i32, i32
  }
}

module attributes {stable_mosaic.version = 11 : i64} {
  func.func @_conv_kernel(%arg0: i32, %arg1: i32, %arg2: memref<128x144xf32, #tpu.memory_space<vmem>>, %arg3: memref<144x16xf32, #tpu.memory_space<vmem>>, %arg4: memref<128x16xf32, #tpu.memory_space<vmem>>, %arg5: memref<128x16xf32, #tpu.memory_space<vmem>>) attributes {dimension_semantics = [#tpu.dimension_semantics<parallel>, #tpu.dimension_semantics<parallel>], iteration_bounds = array<i64: 1, 1>, scalar_prefetch = 0 : i64, scratch_operands = 0 : i64, tpu.core_type = #tpu.core_type<tc>, window_params = [{transform_indices = @transform_0, window_bounds = array<i64: 128, 144>}, {transform_indices = @transform_1, window_bounds = array<i64: 144, 16>}, {transform_indices = @transform_2, window_bounds = array<i64: 128, 16>}, {transform_indices = @transform_3, window_bounds = array<i64: 128, 16>}]} {
    %c0 = arith.constant 0 : index
    %c0_0 = arith.constant 0 : index
    %0 = vector.load %arg2[%c0, %c0_0] : memref<128x144xf32, #tpu.memory_space<vmem>>, vector<128x144xf32>
    %c0_1 = arith.constant 0 : index
    %c0_2 = arith.constant 0 : index
    %1 = vector.load %arg3[%c0_1, %c0_2] : memref<144x16xf32, #tpu.memory_space<vmem>>, vector<144x16xf32>
    %cst = arith.constant dense<0.000000e+00> : vector<128x16xf32>
    %2 = tpu.matmul %0, %1, %cst {dimension_numbers = #tpu.dot_dimension_numbers<[1], [0], [0], [1], [0, 0, 1, 1], [], []>} : vector<128x144xf32>, vector<144x16xf32>, vector<128x16xf32> -> vector<128x16xf32>
    %c0_3 = arith.constant 0 : index
    %c0_4 = arith.constant 0 : index
    %3 = vector.load %arg4[%c0_3, %c0_4] : memref<128x16xf32, #tpu.memory_space<vmem>>, vector<128x16xf32>
    %4 = arith.addf %2, %3 : vector<128x16xf32>
    %c0_5 = arith.constant 0 : index
    %c0_6 = arith.constant 0 : index
    %5 = vector.load %arg5[%c0_5, %c0_6] : memref<128x16xf32, #tpu.memory_space<vmem>>, vector<128x16xf32>
    tpu.vector_store %arg5[%c0_5, %c0_6], %4 {strides = array<i32>} : memref<128x16xf32, #tpu.memory_space<vmem>>, vector<128x16xf32>,
    return
  }
  func.func @transform_0(%arg0: i32, %arg1: i32) -> (i32, i32) {
    %c0_i32 = arith.constant 0 : i32
    %c0_i32_0 = arith.constant 0 : i32
    return %arg0, %c0_i32 : i32, i32
  }
  func.func @transform_1(%arg0: i32, %arg1: i32) -> (i32, i32) {
    %c0_i32 = arith.constant 0 : i32
    %c0_i32_0 = arith.constant 0 : i32
    return %c0_i32, %arg1 : i32, i32
  }
  func.func @transform_2(%arg0: i32, %arg1: i32) -> (i32, i32) {
    %c0_i32 = arith.constant 0 : i32
    return %arg0, %arg1 : i32, i32
  }
  func.func @transform_3(%arg0: i32, %arg1: i32) -> (i32, i32) {
    %c0_i32 = arith.constant 0 : i32
    return %arg0, %arg1 : i32, i32
  }
}

module attributes {stable_mosaic.version = 11 : i64} {
  func.func @_conv_kernel(%arg0: i32, %arg1: i32, %arg2: memref<128x144xf32, #tpu.memory_space<vmem>>, %arg3: memref<144x16xf32, #tpu.memory_space<vmem>>, %arg4: memref<1x16xf32, #tpu.memory_space<vmem>>, %arg5: memref<128x16xf32, #tpu.memory_space<vmem>>) attributes {dimension_semantics = [#tpu.dimension_semantics<parallel>, #tpu.dimension_semantics<parallel>], iteration_bounds = array<i64: 1, 1>, scalar_prefetch = 0 : i64, scratch_operands = 0 : i64, tpu.core_type = #tpu.core_type<tc>, window_params = [{transform_indices = @transform_0, window_bounds = array<i64: 128, 144>}, {transform_indices = @transform_1, window_bounds = array<i64: 144, 16>}, {transform_indices = @transform_2, window_bounds = array<i64: 1, 16>}, {transform_indices = @transform_3, window_bounds = array<i64: 128, 16>}]} {
    %c0 = arith.constant 0 : index
    %c0_0 = arith.constant 0 : index
    %0 = vector.load %arg2[%c0, %c0_0] : memref<128x144xf32, #tpu.memory_space<vmem>>, vector<128x144xf32>
    %c0_1 = arith.constant 0 : index
    %c0_2 = arith.constant 0 : index
    %1 = vector.load %arg3[%c0_1, %c0_2] : memref<144x16xf32, #tpu.memory_space<vmem>>, vector<144x16xf32>
    %cst = arith.constant dense<0.000000e+00> : vector<128x16xf32>
    %2 = tpu.matmul %0, %1, %cst {dimension_numbers = #tpu.dot_dimension_numbers<[1], [0], [0], [1], [0, 0, 1, 1], [], []>} : vector<128x144xf32>, vector<144x16xf32>, vector<128x16xf32> -> vector<128x16xf32>
    %c0_3 = arith.constant 0 : index
    %c0_4 = arith.constant 0 : index
    %3 = vector.load %arg4[%c0_3, %c0_4] : memref<1x16xf32, #tpu.memory_space<vmem>>, vector<1x16xf32>
    %4 = vector.broadcast %3 : vector<1x16xf32> to vector<128x16xf32>
    %5 = arith.addf %2, %4 : vector<128x16xf32>
    %cst_5 = arith.constant 0.000000e+00 : f32
    %6 = vector.broadcast %cst_5 : f32 to vector<128x16xf32>
    %7 = arith.cmpf ogt, %5, %6 : vector<128x16xf32>
    %cst_6 = arith.constant 1.000000e-01 : f32
    %8 = vector.broadcast %cst_6 : f32 to vector<128x16xf32>
    %9 = arith.mulf %8, %5 : vector<128x16xf32>
    %10 = arith.select %7, %5, %9 : vector<128x16xi1>, vector<128x16xf32>
    %c0_7 = arith.constant 0 : index
    %c0_8 = arith.constant 0 : index
    %11 = vector.load %arg5[%c0_7, %c0_8] : memref<128x16xf32, #tpu.memory_space<vmem>>, vector<128x16xf32>
    tpu.vector_store %arg5[%c0_7, %c0_8], %10 {strides = array<i32>} : memref<128x16xf32, #tpu.memory_space<vmem>>, vector<128x16xf32>,
    return
  }
  func.func @transform_0(%arg0: i32, %arg1: i32) -> (i32, i32) {
    %c0_i32 = arith.constant 0 : i32
    %c0_i32_0 = arith.constant 0 : i32
    return %arg0, %c0_i32 : i32, i32
  }
  func.func @transform_1(%arg0: i32, %arg1: i32) -> (i32, i32) {
    %c0_i32 = arith.constant 0 : i32
    %c0_i32_0 = arith.constant 0 : i32
    return %c0_i32, %arg1 : i32, i32
  }
  func.func @transform_2(%arg0: i32, %arg1: i32) -> (i32, i32) {
    %c0_i32 = arith.constant 0 : i32
    %c0_i32_0 = arith.constant 0 : i32
    return %c0_i32, %arg1 : i32, i32
  }
  func.func @transform_3(%arg0: i32, %arg1: i32) -> (i32, i32) {
    %c0_i32 = arith.constant 0 : i32
    return %arg0, %arg1 : i32, i32
  }
}

module attributes {stable_mosaic.version = 11 : i64} {
  func.func @_conv_kernel(%arg0: i32, %arg1: i32, %arg2: memref<128x144xf32, #tpu.memory_space<vmem>>, %arg3: memref<144x16xf32, #tpu.memory_space<vmem>>, %arg4: memref<128x16xf32, #tpu.memory_space<vmem>>, %arg5: memref<128x16xf32, #tpu.memory_space<vmem>>) attributes {dimension_semantics = [#tpu.dimension_semantics<parallel>, #tpu.dimension_semantics<parallel>], iteration_bounds = array<i64: 1, 1>, scalar_prefetch = 0 : i64, scratch_operands = 0 : i64, tpu.core_type = #tpu.core_type<tc>, window_params = [{transform_indices = @transform_0, window_bounds = array<i64: 128, 144>}, {transform_indices = @transform_1, window_bounds = array<i64: 144, 16>}, {transform_indices = @transform_2, window_bounds = array<i64: 128, 16>}, {transform_indices = @transform_3, window_bounds = array<i64: 128, 16>}]} {
    %c0 = arith.constant 0 : index
    %c0_0 = arith.constant 0 : index
    %0 = vector.load %arg2[%c0, %c0_0] : memref<128x144xf32, #tpu.memory_space<vmem>>, vector<128x144xf32>
    %c0_1 = arith.constant 0 : index
    %c0_2 = arith.constant 0 : index
    %1 = vector.load %arg3[%c0_1, %c0_2] : memref<144x16xf32, #tpu.memory_space<vmem>>, vector<144x16xf32>
    %cst = arith.constant dense<0.000000e+00> : vector<128x16xf32>
    %2 = tpu.matmul %0, %1, %cst {dimension_numbers = #tpu.dot_dimension_numbers<[1], [0], [0], [1], [0, 0, 1, 1], [], []>} : vector<128x144xf32>, vector<144x16xf32>, vector<128x16xf32> -> vector<128x16xf32>
    %c0_3 = arith.constant 0 : index
    %c0_4 = arith.constant 0 : index
    %3 = vector.load %arg4[%c0_3, %c0_4] : memref<128x16xf32, #tpu.memory_space<vmem>>, vector<128x16xf32>
    %4 = arith.addf %2, %3 : vector<128x16xf32>
    %c0_5 = arith.constant 0 : index
    %c0_6 = arith.constant 0 : index
    %5 = vector.load %arg5[%c0_5, %c0_6] : memref<128x16xf32, #tpu.memory_space<vmem>>, vector<128x16xf32>
    tpu.vector_store %arg5[%c0_5, %c0_6], %4 {strides = array<i32>} : memref<128x16xf32, #tpu.memory_space<vmem>>, vector<128x16xf32>,
    return
  }
  func.func @transform_0(%arg0: i32, %arg1: i32) -> (i32, i32) {
    %c0_i32 = arith.constant 0 : i32
    %c0_i32_0 = arith.constant 0 : i32
    return %arg0, %c0_i32 : i32, i32
  }
  func.func @transform_1(%arg0: i32, %arg1: i32) -> (i32, i32) {
    %c0_i32 = arith.constant 0 : i32
    %c0_i32_0 = arith.constant 0 : i32
    return %c0_i32, %arg1 : i32, i32
  }
  func.func @transform_2(%arg0: i32, %arg1: i32) -> (i32, i32) {
    %c0_i32 = arith.constant 0 : i32
    return %arg0, %arg1 : i32, i32
  }
  func.func @transform_3(%arg0: i32, %arg1: i32) -> (i32, i32) {
    %c0_i32 = arith.constant 0 : i32
    return %arg0, %arg1 : i32, i32
  }
}

</mosaic_0001>

<llo_original>
// kernel: network_block_forward.4
$region0: #{network_block_forward.4}
  #allocation0 [shape = 'u32[]', space=smem, size = 0x4, offset = 0x4, fixed_abs, tag = 'smem constant byte address 0x4 - core index']
  #allocation1 [shape = 'u32[72,128]{1,0:T(1,128)}', space=vmem, size = 0x9000, scoped, tag = 'internal scratch']
  %s0 = inlined_call_operand.vmem [shape: f32[128,72], index: 0, kind: input, shape index: {}]
  %s1 = inlined_call_operand.vmem [shape: f32[72,16], index: 1, kind: input, shape index: {}]
  %s2 = inlined_call_operand.vmem [shape: f32[1,16], index: 2, kind: input, shape index: {}]
  %s3 = inlined_call_operand.vmem [shape: f32[72,16], index: 3, kind: input, shape index: {}]
  %s4 = inlined_call_operand.vmem [shape: f32[128,16], index: 4, kind: output, shape index: {0}]
  %s5 = inlined_call_operand.vmem [shape: f32[128,16], index: 5, kind: output, shape index: {1}]
  %6 = xla_tuple %s4, %s5
  %s7 = sld [smem:[#allocation0]]
  $region34: #{network_block_forward.4} parent=0
    _
  %s9 = ssub.s32 1, %s7
  %s10 = scalar_select 0, %s9, %s7
  // Predicated region
  $region2: #{network_block_forward.4} parent=0 // pred_check
    _
  $region3: #{network_block_forward.4} parent=0 // pred_check_branch
    %12 = sbr.rel (0) target = $region5
  $region4: #{network_block_forward.4} parent=0 // pred_region
    _
  $region5: #{network_block_forward.4} parent=0 // pred_fallthru
    _
  // Predicated region
  $region6: #{network_block_forward.4} parent=0 // pred_check
    _
  $region7: #{network_block_forward.4} parent=0 // pred_check_branch
    %14 = sbr.rel (0) target = $region9
  $region8: #{network_block_forward.4} parent=0 // pred_region
    _
  $region9: #{network_block_forward.4} parent=0 // pred_fallthru
    _
  // Predicated region
  $region10: #{network_block_forward.4} parent=0 // pred_check
    _
  $region11: #{network_block_forward.4} parent=0 // pred_check_branch
    %16 = sbr.rel (0) target = $region13
  $region12: #{network_block_forward.4} parent=0 // pred_region
    _
  $region13: #{network_block_forward.4} parent=0 // pred_fallthru
    _
  // Predicated region
  $region14: #{network_block_forward.4} parent=0 // pred_check
    _
  $region15: #{network_block_forward.4} parent=0 // pred_check_branch
    %18 = sbr.rel (0) target = $region17
  $region16: #{network_block_forward.4} parent=0 // pred_region
    _
  $region17: #{network_block_forward.4} parent=0 // pred_fallthru
    _
  %v19 = vld [vmem:[%s0] sm:$0xff]
  %v20 = vld [vmem:[%s0 + $0x8] sm:$0xff]
  %v21 = vld [vmem:[%s0 + $0x10] sm:$0xff]
  %v22 = vld [vmem:[%s0 + $0x18] sm:$0xff]
  %v23 = vld [vmem:[%s0 + $0x20] sm:$0xff]
  %v24 = vld [vmem:[%s0 + $0x28] sm:$0xff]
  %v25 = vld [vmem:[%s0 + $0x30] sm:$0xff]
  %v26 = vld [vmem:[%s0 + $0x38] sm:$0xff]
  %v27 = vld [vmem:[%s0 + $0x40] sm:$0xff]
  %v28 = vld [vmem:[%s0 + $0x48] sm:$0xff]
  %v29 = vld [vmem:[%s0 + $0x50] sm:$0xff]
  %v30 = vld [vmem:[%s0 + $0x58] sm:$0xff]
  %v31 = vld [vmem:[%s0 + $0x60] sm:$0xff]
  %v32 = vld [vmem:[%s0 + $0x68] sm:$0xff]
  %v33 = vld [vmem:[%s0 + $0x70] sm:$0xff]
  %v34 = vld [vmem:[%s0 + $0x78] sm:$0xff]
  %v35 = vld [vmem:[%s1] sm:$0xff]
  %v36 = vld [vmem:[%s1 + $0x8] sm:$0xff]
  %v37 = vld [vmem:[%s1 + $0x10] sm:$0xff]
  %v38 = vld [vmem:[%s1 + $0x18] sm:$0xff]
  %v39 = vld [vmem:[%s1 + $0x20] sm:$0xff]
  %v40 = vld [vmem:[%s1 + $0x28] sm:$0xff]
  %v41 = vld [vmem:[%s1 + $0x30] sm:$0xff]
  %v42 = vld [vmem:[%s1 + $0x38] sm:$0xff]
  %v43 = vld [vmem:[%s1 + $0x40] sm:$0xff]
  %v44 = vld [vmem:[%s2] sm:$0x1]
  %v46 = vperm.slane %v44, 0
  %vm48 = vcmask 588800
  %v50 = vsel %vm48, %v19, 0
  %v53 = vsel %vm48, %v20, 0
  %v56 = vsel %vm48, %v21, 0
  %v59 = vsel %vm48, %v22, 0
  %v62 = vsel %vm48, %v23, 0
  %v65 = vsel %vm48, %v24, 0
  %v68 = vsel %vm48, %v25, 0
  %v71 = vsel %vm48, %v26, 0
  %v74 = vsel %vm48, %v27, 0
  %v77 = vsel %vm48, %v28, 0
  %v80 = vsel %vm48, %v29, 0
  %v83 = vsel %vm48, %v30, 0
  %v86 = vsel %vm48, %v31, 0
  %v89 = vsel %vm48, %v32, 0
  %v92 = vsel %vm48, %v33, 0
  %v95 = vsel %vm48, %v34, 0
  %97 = vmatpush.msra.mxu0 0.0
  %98 = vmatpush.msra.mxu0 0.0
  %99 = vmatpush.msra.mxu0 0.0
  %100 = vmatpush.msra.mxu0 0.0
  %101 = vmatpush.msra.mxu0 0.0
  %102 = vmatpush.msra.mxu0 0.0
  %103 = vmatpush.msra.mxu0 0.0
  %104 = vmatpush.msra.mxu0 %v43
  %105 = vmatpush.msra.mxu0 %v42
  %106 = vmatpush.msra.mxu0 %v41
  %107 = vmatpush.msra.mxu0 %v40
  %108 = vmatpush.msra.mxu0 %v39
  %109 = vmatpush.msra.mxu0 %v38
  %110 = vmatpush.msra.mxu0 %v37
  %111 = vmatpush.msra.mxu0 %v36
  %112 = vmatpush.msra.mxu0 %v35
  %113 = vmatmul.f32.gmra.mxu0 %v50
  %v114 = vpop.f32.mrf.mxu0
  %v115 = vadd.f32 %v46, %v114
  %116 = vmatmul.f32.gmra.mxu0 %v53
  %v117 = vpop.f32.mrf.mxu0
  %v118 = vadd.f32 %v46, %v117
  %119 = vmatmul.f32.gmra.mxu0 %v56
  %v120 = vpop.f32.mrf.mxu0
  %v121 = vadd.f32 %v46, %v120
  %122 = vmatmul.f32.gmra.mxu0 %v59
  %v123 = vpop.f32.mrf.mxu0
  %v124 = vadd.f32 %v46, %v123
  %125 = vmatmul.f32.gmra.mxu0 %v62
  %v126 = vpop.f32.mrf.mxu0
  %v127 = vadd.f32 %v46, %v126
  %128 = vmatmul.f32.gmra.mxu0 %v65
  %v129 = vpop.f32.mrf.mxu0
  %v130 = vadd.f32 %v46, %v129
  %131 = vmatmul.f32.gmra.mxu0 %v68
  %v132 = vpop.f32.mrf.mxu0
  %v133 = vadd.f32 %v46, %v132
  %134 = vmatmul.f32.gmra.mxu0 %v71
  %v135 = vpop.f32.mrf.mxu0
  %v136 = vadd.f32 %v46, %v135
  %137 = vmatmul.f32.gmra.mxu0 %v74
  %v138 = vpop.f32.mrf.mxu0
  %v139 = vadd.f32 %v46, %v138
  %140 = vmatmul.f32.gmra.mxu0 %v77
  %v141 = vpop.f32.mrf.mxu0
  %v142 = vadd.f32 %v46, %v141
  %143 = vmatmul.f32.gmra.mxu0 %v80
  %v144 = vpop.f32.mrf.mxu0
  %v145 = vadd.f32 %v46, %v144
  %146 = vmatmul.f32.gmra.mxu0 %v83
  %v147 = vpop.f32.mrf.mxu0
  %v148 = vadd.f32 %v46, %v147
  %149 = vmatmul.f32.gmra.mxu0 %v86
  %v150 = vpop.f32.mrf.mxu0
  %v151 = vadd.f32 %v46, %v150
  %152 = vmatmul.f32.gmra.mxu0 %v89
  %v153 = vpop.f32.mrf.mxu0
  %v154 = vadd.f32 %v46, %v153
  %155 = vmatmul.f32.gmra.mxu0 %v92
  %v156 = vpop.f32.mrf.mxu0
  %v157 = vadd.f32 %v46, %v156
  %158 = vmatmul.f32.gmra.mxu0 %v95
  %v159 = vpop.f32.mrf.mxu0
  %v160 = vadd.f32 %v46, %v159
  %161 = vdwg.mxu0
  %vm162 = vcmp.gt.f32.partialorder %v115, 0.0
  %vm163 = vcmp.gt.f32.partialorder %v118, 0.0
  %vm164 = vcmp.gt.f32.partialorder %v121, 0.0
  %vm165 = vcmp.gt.f32.partialorder %v124, 0.0
  %vm166 = vcmp.gt.f32.partialorder %v127, 0.0
  %vm167 = vcmp.gt.f32.partialorder %v130, 0.0
  %vm168 = vcmp.gt.f32.partialorder %v133, 0.0
  %vm169 = vcmp.gt.f32.partialorder %v136, 0.0
  %vm170 = vcmp.gt.f32.partialorder %v139, 0.0
  %vm171 = vcmp.gt.f32.partialorder %v142, 0.0
  %vm172 = vcmp.gt.f32.partialorder %v145, 0.0
  %vm173 = vcmp.gt.f32.partialorder %v148, 0.0
  %vm174 = vcmp.gt.f32.partialorder %v151, 0.0
  %vm175 = vcmp.gt.f32.partialorder %v154, 0.0
  %vm176 = vcmp.gt.f32.partialorder %v157, 0.0
  %vm177 = vcmp.gt.f32.partialorder %v160, 0.0
  %v178 = vmul.f32 %v115, 0.1
  %v179 = vmul.f32 %v118, 0.1
  %v180 = vmul.f32 %v121, 0.1
  %v181 = vmul.f32 %v124, 0.1
  %v182 = vmul.f32 %v127, 0.1
  %v183 = vmul.f32 %v130, 0.1
  %v184 = vmul.f32 %v133, 0.1
  %v185 = vmul.f32 %v136, 0.1
  %v186 = vmul.f32 %v139, 0.1
  %v187 = vmul.f32 %v142, 0.1
  %v188 = vmul.f32 %v145, 0.1
  %v189 = vmul.f32 %v148, 0.1
  %v190 = vmul.f32 %v151, 0.1
  %v191 = vmul.f32 %v154, 0.1
  %v192 = vmul.f32 %v157, 0.1
  %v193 = vmul.f32 %v160, 0.1
  %v194 = vsel %vm162, %v115, %v178
  %v195 = vsel %vm163, %v118, %v179
  %v196 = vsel %vm164, %v121, %v180
  %v197 = vsel %vm165, %v124, %v181
  %v198 = vsel %vm166, %v127, %v182
  %v199 = vsel %vm167, %v130, %v183
  %v200 = vsel %vm168, %v133, %v184
  %v201 = vsel %vm169, %v136, %v185
  %v202 = vsel %vm170, %v139, %v186
  %v203 = vsel %vm171, %v142, %v187
  %v204 = vsel %vm172, %v145, %v188
  %v205 = vsel %vm173, %v148, %v189
  %v206 = vsel %vm174, %v151, %v190
  %v207 = vsel %vm175, %v154, %v191
  %v208 = vsel %vm176, %v157, %v192
  %v209 = vsel %vm177, %v160, %v193
  %vm210 = vcmask 130048
  %211 = vst.msk [vmem:[%s4] sm:$0xff] %vm210, %v194
  %212 = vst.msk [vmem:[%s4 + $0x8] sm:$0xff] %vm210, %v195
  %213 = vst.msk [vmem:[%s4 + $0x10] sm:$0xff] %vm210, %v196
  %214 = vst.msk [vmem:[%s4 + $0x18] sm:$0xff] %vm210, %v197
  %215 = vst.msk [vmem:[%s4 + $0x20] sm:$0xff] %vm210, %v198
  %216 = vst.msk [vmem:[%s4 + $0x28] sm:$0xff] %vm210, %v199
  %217 = vst.msk [vmem:[%s4 + $0x30] sm:$0xff] %vm210, %v200
  %218 = vst.msk [vmem:[%s4 + $0x38] sm:$0xff] %vm210, %v201
  %219 = vst.msk [vmem:[%s4 + $0x40] sm:$0xff] %vm210, %v202
  %220 = vst.msk [vmem:[%s4 + $0x48] sm:$0xff] %vm210, %v203
  %221 = vst.msk [vmem:[%s4 + $0x50] sm:$0xff] %vm210, %v204
  %222 = vst.msk [vmem:[%s4 + $0x58] sm:$0xff] %vm210, %v205
  %223 = vst.msk [vmem:[%s4 + $0x60] sm:$0xff] %vm210, %v206
  %224 = vst.msk [vmem:[%s4 + $0x68] sm:$0xff] %vm210, %v207
  %225 = vst.msk [vmem:[%s4 + $0x70] sm:$0xff] %vm210, %v208
  %226 = vst.msk [vmem:[%s4 + $0x78] sm:$0xff] %vm210, %v209
  %v227 = vld [vmem:[%s3] sm:$0xff]
  %v228 = vld [vmem:[%s3 + $0x8] sm:$0xff]
  %v229 = vld [vmem:[%s3 + $0x10] sm:$0xff]
  %v230 = vld [vmem:[%s3 + $0x18] sm:$0xff]
  %v231 = vld [vmem:[%s3 + $0x20] sm:$0xff]
  %v232 = vld [vmem:[%s3 + $0x28] sm:$0xff]
  %v233 = vld [vmem:[%s3 + $0x30] sm:$0xff]
  %v234 = vld [vmem:[%s3 + $0x38] sm:$0xff]
  %v235 = vld [vmem:[%s3 + $0x40] sm:$0xff]
  %236 = vmatpush.msra.mxu0 0.0
  %237 = vmatpush.msra.mxu0 0.0
  %238 = vmatpush.msra.mxu0 0.0
  %239 = vmatpush.msra.mxu0 0.0
  %240 = vmatpush.msra.mxu0 0.0
  %241 = vmatpush.msra.mxu0 0.0
  %242 = vmatpush.msra.mxu0 0.0
  %243 = vmatpush.msra.mxu0 %v235
  %244 = vmatpush.msra.mxu0 %v234
  %245 = vmatpush.msra.mxu0 %v233
  %246 = vmatpush.msra.mxu0 %v232
  %247 = vmatpush.msra.mxu0 %v231
  %248 = vmatpush.msra.mxu0 %v230
  %249 = vmatpush.msra.mxu0 %v229
  %250 = vmatpush.msra.mxu0 %v228
  %251 = vmatpush.msra.mxu0 %v227
  %252 = vmatmul.f32.gmra.mxu0 %v50
  %v253 = vpop.f32.mrf.mxu0
  %v254 = vadd.f32 0.0, %v253
  %255 = vmatmul.f32.gmra.mxu0 %v53
  %v256 = vpop.f32.mrf.mxu0
  %v257 = vadd.f32 0.0, %v256
  %258 = vmatmul.f32.gmra.mxu0 %v56
  %v259 = vpop.f32.mrf.mxu0
  %v260 = vadd.f32 0.0, %v259
  %261 = vmatmul.f32.gmra.mxu0 %v59
  %v262 = vpop.f32.mrf.mxu0
  %v263 = vadd.f32 0.0, %v262
  %264 = vmatmul.f32.gmra.mxu0 %v62
  %v265 = vpop.f32.mrf.mxu0
  %v266 = vadd.f32 0.0, %v265
  %267 = vmatmul.f32.gmra.mxu0 %v65
  %v268 = vpop.f32.mrf.mxu0
  %v269 = vadd.f32 0.0, %v268
  %270 = vmatmul.f32.gmra.mxu0 %v68
  %v271 = vpop.f32.mrf.mxu0
  %v272 = vadd.f32 0.0, %v271
  %273 = vmatmul.f32.gmra.mxu0 %v71
  %v274 = vpop.f32.mrf.mxu0
  %v275 = vadd.f32 0.0, %v274
  %276 = vmatmul.f32.gmra.mxu0 %v74
  %v277 = vpop.f32.mrf.mxu0
  %v278 = vadd.f32 0.0, %v277
  %279 = vmatmul.f32.gmra.mxu0 %v77
  %v280 = vpop.f32.mrf.mxu0
  %v281 = vadd.f32 0.0, %v280
  %282 = vmatmul.f32.gmra.mxu0 %v80
  %v283 = vpop.f32.mrf.mxu0
  %v284 = vadd.f32 0.0, %v283
  %285 = vmatmul.f32.gmra.mxu0 %v83
  %v286 = vpop.f32.mrf.mxu0
  %v287 = vadd.f32 0.0, %v286
  %288 = vmatmul.f32.gmra.mxu0 %v86
  %v289 = vpop.f32.mrf.mxu0
  %v290 = vadd.f32 0.0, %v289
  %291 = vmatmul.f32.gmra.mxu0 %v89
  %v292 = vpop.f32.mrf.mxu0
  %v293 = vadd.f32 0.0, %v292
  %294 = vmatmul.f32.gmra.mxu0 %v92
  %v295 = vpop.f32.mrf.mxu0
  %v296 = vadd.f32 0.0, %v295
  %297 = vmatmul.f32.gmra.mxu0 %v95
  %v298 = vpop.f32.mrf.mxu0
  %v299 = vadd.f32 0.0, %v298
  %300 = vdwg.mxu0
  %301 = vst.msk [vmem:[%s5] sm:$0xff] %vm210, %v254
  %302 = vst.msk [vmem:[%s5 + $0x8] sm:$0xff] %vm210, %v257
  %303 = vst.msk [vmem:[%s5 + $0x10] sm:$0xff] %vm210, %v260
  %304 = vst.msk [vmem:[%s5 + $0x18] sm:$0xff] %vm210, %v263
  %305 = vst.msk [vmem:[%s5 + $0x20] sm:$0xff] %vm210, %v266
  %306 = vst.msk [vmem:[%s5 + $0x28] sm:$0xff] %vm210, %v269
  %307 = vst.msk [vmem:[%s5 + $0x30] sm:$0xff] %vm210, %v272
  %308 = vst.msk [vmem:[%s5 + $0x38] sm:$0xff] %vm210, %v275
  %309 = vst.msk [vmem:[%s5 + $0x40] sm:$0xff] %vm210, %v278
  %310 = vst.msk [vmem:[%s5 + $0x48] sm:$0xff] %vm210, %v281
  %311 = vst.msk [vmem:[%s5 + $0x50] sm:$0xff] %vm210, %v284
  %312 = vst.msk [vmem:[%s5 + $0x58] sm:$0xff] %vm210, %v287
  %313 = vst.msk [vmem:[%s5 + $0x60] sm:$0xff] %vm210, %v290
  %314 = vst.msk [vmem:[%s5 + $0x68] sm:$0xff] %vm210, %v293
  %315 = vst.msk [vmem:[%s5 + $0x70] sm:$0xff] %vm210, %v296
  %316 = vst.msk [vmem:[%s5 + $0x78] sm:$0xff] %vm210, %v299
  // Predicated region
  $region18: #{network_block_forward.4} parent=0 // pred_check
    _
  $region19: #{network_block_forward.4} parent=0 // pred_check_branch
    %318 = sbr.rel (0) target = $region21
  $region20: #{network_block_forward.4} parent=0 // pred_region
    _
  $region21: #{network_block_forward.4} parent=0 // pred_fallthru
    _
  // Predicated region
  $region22: #{network_block_forward.4} parent=0 // pred_check
    _
  $region23: #{network_block_forward.4} parent=0 // pred_check_branch
    %320 = sbr.rel (0) target = $region25
  $region24: #{network_block_forward.4} parent=0 // pred_region
    _
  $region25: #{network_block_forward.4} parent=0 // pred_fallthru
    _
  // Predicated region
  $region26: #{network_block_forward.4} parent=0 // pred_check
    _
  $region27: #{network_block_forward.4} parent=0 // pred_check_branch
    %322 = sbr.rel (0) target = $region29
  $region28: #{network_block_forward.4} parent=0 // pred_region
    _
  $region29: #{network_block_forward.4} parent=0 // pred_fallthru
    _
  // Predicated region
  $region30: #{network_block_forward.4} parent=0 // pred_check
    _
  $region31: #{network_block_forward.4} parent=0 // pred_check_branch
    %324 = sbr.rel (0) target = $region33
  $region32: #{network_block_forward.4} parent=0 // pred_region
    _
  $region33: #{network_block_forward.4} parent=0 // pred_fallthru
    _

// kernel: network_block_forward.5
$region0: #{network_block_forward.5}
  #allocation0 [shape = 'u32[]', space=smem, size = 0x4, offset = 0x4, fixed_abs, tag = 'smem constant byte address 0x4 - core index']
  #allocation1 [shape = 'u32[72,128]{1,0:T(1,128)}', space=vmem, size = 0x9000, scoped, tag = 'internal scratch']
  %s0 = inlined_call_operand.vmem [shape: f32[128,144], index: 0, kind: input, shape index: {}]
  %s1 = inlined_call_operand.vmem [shape: f32[144,16], index: 1, kind: input, shape index: {}]
  %s2 = inlined_call_operand.vmem [shape: f32[128,16], index: 2, kind: input, shape index: {}]
  %s3 = inlined_call_operand.vmem [shape: f32[128,16], index: 3, kind: output, shape index: {}]
  %s4 = sld [smem:[#allocation0]]
  $region22: #{network_block_forward.5} parent=0
    _
  %s6 = ssub.s32 1, %s4
  %s7 = scalar_select 0, %s6, %s4
  // Predicated region
  $region2: #{network_block_forward.5} parent=0 // pred_check
    _
  $region3: #{network_block_forward.5} parent=0 // pred_check_branch
    %9 = sbr.rel (0) target = $region5
  $region4: #{network_block_forward.5} parent=0 // pred_region
    _
  $region5: #{network_block_forward.5} parent=0 // pred_fallthru
    _
  // Predicated region
  $region6: #{network_block_forward.5} parent=0 // pred_check
    _
  $region7: #{network_block_forward.5} parent=0 // pred_check_branch
    %11 = sbr.rel (0) target = $region9
  $region8: #{network_block_forward.5} parent=0 // pred_region
    _
  $region9: #{network_block_forward.5} parent=0 // pred_fallthru
    _
  // Predicated region
  $region10: #{network_block_forward.5} parent=0 // pred_check
    _
  $region11: #{network_block_forward.5} parent=0 // pred_check_branch
    %13 = sbr.rel (0) target = $region13
  $region12: #{network_block_forward.5} parent=0 // pred_region
    _
  $region13: #{network_block_forward.5} parent=0 // pred_fallthru
    _
  %v14 = vld [vmem:[%s0] sm:$0xff]
  %v15 = vld [vmem:[%s0 + $0x8] sm:$0xff]
  %v16 = vld [vmem:[%s0 + $0x10] sm:$0xff]
  %v17 = vld [vmem:[%s0 + $0x18] sm:$0xff]
  %v18 = vld [vmem:[%s0 + $0x20] sm:$0xff]
  %v19 = vld [vmem:[%s0 + $0x28] sm:$0xff]
  %v20 = vld [vmem:[%s0 + $0x30] sm:$0xff]
  %v21 = vld [vmem:[%s0 + $0x38] sm:$0xff]
  %v22 = vld [vmem:[%s0 + $0x40] sm:$0xff]
  %v23 = vld [vmem:[%s0 + $0x48] sm:$0xff]
  %v24 = vld [vmem:[%s0 + $0x50] sm:$0xff]
  %v25 = vld [vmem:[%s0 + $0x58] sm:$0xff]
  %v26 = vld [vmem:[%s0 + $0x60] sm:$0xff]
  %v27 = vld [vmem:[%s0 + $0x68] sm:$0xff]
  %v28 = vld [vmem:[%s0 + $0x70] sm:$0xff]
  %v29 = vld [vmem:[%s0 + $0x78] sm:$0xff]
  %v30 = vld [vmem:[%s0 + $0x80] sm:$0xff]
  %v31 = vld [vmem:[%s0 + $0x88] sm:$0xff]
  %v32 = vld [vmem:[%s0 + $0x90] sm:$0xff]
  %v33 = vld [vmem:[%s0 + $0x98] sm:$0xff]
  %v34 = vld [vmem:[%s0 + $0xa0] sm:$0xff]
  %v35 = vld [vmem:[%s0 + $0xa8] sm:$0xff]
  %v36 = vld [vmem:[%s0 + $0xb0] sm:$0xff]
  %v37 = vld [vmem:[%s0 + $0xb8] sm:$0xff]
  %v38 = vld [vmem:[%s0 + $0xc0] sm:$0xff]
  %v39 = vld [vmem:[%s0 + $0xc8] sm:$0xff]
  %v40 = vld [vmem:[%s0 + $0xd0] sm:$0xff]
  %v41 = vld [vmem:[%s0 + $0xd8] sm:$0xff]
  %v42 = vld [vmem:[%s0 + $0xe0] sm:$0xff]
  %v43 = vld [vmem:[%s0 + $0xe8] sm:$0xff]
  %v44 = vld [vmem:[%s0 + $0xf0] sm:$0xff]
  %v45 = vld [vmem:[%s0 + $0xf8] sm:$0xff]
  %v46 = vld [vmem:[%s1] sm:$0xff]
  %v47 = vld [vmem:[%s1 + $0x8] sm:$0xff]
  %v48 = vld [vmem:[%s1 + $0x10] sm:$0xff]
  %v49 = vld [vmem:[%s1 + $0x18] sm:$0xff]
  %v50 = vld [vmem:[%s1 + $0x20] sm:$0xff]
  %v51 = vld [vmem:[%s1 + $0x28] sm:$0xff]
  %v52 = vld [vmem:[%s1 + $0x30] sm:$0xff]
  %v53 = vld [vmem:[%s1 + $0x38] sm:$0xff]
  %v54 = vld [vmem:[%s1 + $0x40] sm:$0xff]
  %v55 = vld [vmem:[%s1 + $0x48] sm:$0xff]
  %v56 = vld [vmem:[%s1 + $0x50] sm:$0xff]
  %v57 = vld [vmem:[%s1 + $0x58] sm:$0xff]
  %v58 = vld [vmem:[%s1 + $0x60] sm:$0xff]
  %v59 = vld [vmem:[%s1 + $0x68] sm:$0xff]
  %v60 = vld [vmem:[%s1 + $0x70] sm:$0xff]
  %v61 = vld [vmem:[%s1 + $0x78] sm:$0xff]
  %v62 = vld [vmem:[%s1 + $0x80] sm:$0xff]
  %v63 = vld [vmem:[%s1 + $0x88] sm:$0xff]
  %v64 = vld [vmem:[%s2] sm:$0xff]
  %v65 = vld [vmem:[%s2 + $0x8] sm:$0xff]
  %v66 = vld [vmem:[%s2 + $0x10] sm:$0xff]
  %v67 = vld [vmem:[%s2 + $0x18] sm:$0xff]
  %v68 = vld [vmem:[%s2 + $0x20] sm:$0xff]
  %v69 = vld [vmem:[%s2 + $0x28] sm:$0xff]
  %v70 = vld [vmem:[%s2 + $0x30] sm:$0xff]
  %v71 = vld [vmem:[%s2 + $0x38] sm:$0xff]
  %v72 = vld [vmem:[%s2 + $0x40] sm:$0xff]
  %v73 = vld [vmem:[%s2 + $0x48] sm:$0xff]
  %v74 = vld [vmem:[%s2 + $0x50] sm:$0xff]
  %v75 = vld [vmem:[%s2 + $0x58] sm:$0xff]
  %v76 = vld [vmem:[%s2 + $0x60] sm:$0xff]
  %v77 = vld [vmem:[%s2 + $0x68] sm:$0xff]
  %v78 = vld [vmem:[%s2 + $0x70] sm:$0xff]
  %v79 = vld [vmem:[%s2 + $0x78] sm:$0xff]
  %vm80 = vcmask 130048
  %v82 = vsel %vm80, %v15, 0
  %v85 = vsel %vm80, %v17, 0
  %v88 = vsel %vm80, %v19, 0
  %v91 = vsel %vm80, %v21, 0
  %v94 = vsel %vm80, %v23, 0
  %v97 = vsel %vm80, %v25, 0
  %v100 = vsel %vm80, %v27, 0
  %v103 = vsel %vm80, %v29, 0
  %v106 = vsel %vm80, %v31, 0
  %v109 = vsel %vm80, %v33, 0
  %v112 = vsel %vm80, %v35, 0
  %v115 = vsel %vm80, %v37, 0
  %v118 = vsel %vm80, %v39, 0
  %v121 = vsel %vm80, %v41, 0
  %v124 = vsel %vm80, %v43, 0
  %v127 = vsel %vm80, %v45, 0
  %129 = vmatpush.msra.mxu0 %v61
  %130 = vmatpush.msra.mxu0 %v60
  %131 = vmatpush.msra.mxu0 %v59
  %132 = vmatpush.msra.mxu0 %v58
  %133 = vmatpush.msra.mxu0 %v57
  %134 = vmatpush.msra.mxu0 %v56
  %135 = vmatpush.msra.mxu0 %v55
  %136 = vmatpush.msra.mxu0 %v54
  %137 = vmatpush.msra.mxu0 %v53
  %138 = vmatpush.msra.mxu0 %v52
  %139 = vmatpush.msra.mxu0 %v51
  %140 = vmatpush.msra.mxu0 %v50
  %141 = vmatpush.msra.mxu0 %v49
  %142 = vmatpush.msra.mxu0 %v48
  %143 = vmatpush.msra.mxu0 %v47
  %144 = vmatpush.msra.mxu0 %v46
  %145 = vmatmul.f32.gmra.mxu0 %v14
  %v146 = vpop.f32.mrf.mxu0
  %v147 = vadd.f32 %v64, %v146
  %148 = vmatmul.f32.gmra.mxu0 %v16
  %v149 = vpop.f32.mrf.mxu0
  %v150 = vadd.f32 %v65, %v149
  %151 = vmatmul.f32.gmra.mxu0 %v18
  %v152 = vpop.f32.mrf.mxu0
  %v153 = vadd.f32 %v66, %v152
  %154 = vmatmul.f32.gmra.mxu0 %v20
  %v155 = vpop.f32.mrf.mxu0
  %v156 = vadd.f32 %v67, %v155
  %157 = vmatmul.f32.gmra.mxu0 %v22
  %v158 = vpop.f32.mrf.mxu0
  %v159 = vadd.f32 %v68, %v158
  %160 = vmatmul.f32.gmra.mxu0 %v24
  %v161 = vpop.f32.mrf.mxu0
  %v162 = vadd.f32 %v69, %v161
  %163 = vmatmul.f32.gmra.mxu0 %v26
  %v164 = vpop.f32.mrf.mxu0
  %v165 = vadd.f32 %v70, %v164
  %166 = vmatmul.f32.gmra.mxu0 %v28
  %v167 = vpop.f32.mrf.mxu0
  %v168 = vadd.f32 %v71, %v167
  %169 = vmatmul.f32.gmra.mxu0 %v30
  %v170 = vpop.f32.mrf.mxu0
  %v171 = vadd.f32 %v72, %v170
  %172 = vmatmul.f32.gmra.mxu0 %v32
  %v173 = vpop.f32.mrf.mxu0
  %v174 = vadd.f32 %v73, %v173
  %175 = vmatmul.f32.gmra.mxu0 %v34
  %v176 = vpop.f32.mrf.mxu0
  %v177 = vadd.f32 %v74, %v176
  %178 = vmatmul.f32.gmra.mxu0 %v36
  %v179 = vpop.f32.mrf.mxu0
  %v180 = vadd.f32 %v75, %v179
  %181 = vmatmul.f32.gmra.mxu0 %v38
  %v182 = vpop.f32.mrf.mxu0
  %v183 = vadd.f32 %v76, %v182
  %184 = vmatmul.f32.gmra.mxu0 %v40
  %v185 = vpop.f32.mrf.mxu0
  %v186 = vadd.f32 %v77, %v185
  %187 = vmatmul.f32.gmra.mxu0 %v42
  %v188 = vpop.f32.mrf.mxu0
  %v189 = vadd.f32 %v78, %v188
  %190 = vmatmul.f32.gmra.mxu0 %v44
  %v191 = vpop.f32.mrf.mxu0
  %v192 = vadd.f32 %v79, %v191
  %193 = vdwg.mxu0
  %194 = vmatpush.msra.mxu0 0.0
  %195 = vmatpush.msra.mxu0 0.0
  %196 = vmatpush.msra.mxu0 0.0
  %197 = vmatpush.msra.mxu0 0.0
  %198 = vmatpush.msra.mxu0 0.0
  %199 = vmatpush.msra.mxu0 0.0
  %200 = vmatpush.msra.mxu0 0.0
  %201 = vmatpush.msra.mxu0 0.0
  %202 = vmatpush.msra.mxu0 0.0
  %203 = vmatpush.msra.mxu0 0.0
  %204 = vmatpush.msra.mxu0 0.0
  %205 = vmatpush.msra.mxu0 0.0
  %206 = vmatpush.msra.mxu0 0.0
  %207 = vmatpush.msra.mxu0 0.0
  %208 = vmatpush.msra.mxu0 %v63
  %209 = vmatpush.msra.mxu0 %v62
  %210 = vmatmul.f32.gmra.mxu0 %v82
  %v211 = vpop.f32.mrf.mxu0
  %v212 = vadd.f32 %v147, %v211
  %213 = vmatmul.f32.gmra.mxu0 %v85
  %v214 = vpop.f32.mrf.mxu0
  %v215 = vadd.f32 %v150, %v214
  %216 = vmatmul.f32.gmra.mxu0 %v88
  %v217 = vpop.f32.mrf.mxu0
  %v218 = vadd.f32 %v153, %v217
  %219 = vmatmul.f32.gmra.mxu0 %v91
  %v220 = vpop.f32.mrf.mxu0
  %v221 = vadd.f32 %v156, %v220
  %222 = vmatmul.f32.gmra.mxu0 %v94
  %v223 = vpop.f32.mrf.mxu0
  %v224 = vadd.f32 %v159, %v223
  %225 = vmatmul.f32.gmra.mxu0 %v97
  %v226 = vpop.f32.mrf.mxu0
  %v227 = vadd.f32 %v162, %v226
  %228 = vmatmul.f32.gmra.mxu0 %v100
  %v229 = vpop.f32.mrf.mxu0
  %v230 = vadd.f32 %v165, %v229
  %231 = vmatmul.f32.gmra.mxu0 %v103
  %v232 = vpop.f32.mrf.mxu0
  %v233 = vadd.f32 %v168, %v232
  %234 = vmatmul.f32.gmra.mxu0 %v106
  %v235 = vpop.f32.mrf.mxu0
  %v236 = vadd.f32 %v171, %v235
  %237 = vmatmul.f32.gmra.mxu0 %v109
  %v238 = vpop.f32.mrf.mxu0
  %v239 = vadd.f32 %v174, %v238
  %240 = vmatmul.f32.gmra.mxu0 %v112
  %v241 = vpop.f32.mrf.mxu0
  %v242 = vadd.f32 %v177, %v241
  %243 = vmatmul.f32.gmra.mxu0 %v115
  %v244 = vpop.f32.mrf.mxu0
  %v245 = vadd.f32 %v180, %v244
  %246 = vmatmul.f32.gmra.mxu0 %v118
  %v247 = vpop.f32.mrf.mxu0
  %v248 = vadd.f32 %v183, %v247
  %249 = vmatmul.f32.gmra.mxu0 %v121
  %v250 = vpop.f32.mrf.mxu0
  %v251 = vadd.f32 %v186, %v250
  %252 = vmatmul.f32.gmra.mxu0 %v124
  %v253 = vpop.f32.mrf.mxu0
  %v254 = vadd.f32 %v189, %v253
  %255 = vmatmul.f32.gmra.mxu0 %v127
  %v256 = vpop.f32.mrf.mxu0
  %v257 = vadd.f32 %v192, %v256
  %258 = vdwg.mxu0
  %259 = vst.msk [vmem:[%s3] sm:$0xff] %vm80, %v212
  %260 = vst.msk [vmem:[%s3 + $0x8] sm:$0xff] %vm80, %v215
  %261 = vst.msk [vmem:[%s3 + $0x10] sm:$0xff] %vm80, %v218
  %262 = vst.msk [vmem:[%s3 + $0x18] sm:$0xff] %vm80, %v221
  %263 = vst.msk [vmem:[%s3 + $0x20] sm:$0xff] %vm80, %v224
  %264 = vst.msk [vmem:[%s3 + $0x28] sm:$0xff] %vm80, %v227
  %265 = vst.msk [vmem:[%s3 + $0x30] sm:$0xff] %vm80, %v230
  %266 = vst.msk [vmem:[%s3 + $0x38] sm:$0xff] %vm80, %v233
  %267 = vst.msk [vmem:[%s3 + $0x40] sm:$0xff] %vm80, %v236
  %268 = vst.msk [vmem:[%s3 + $0x48] sm:$0xff] %vm80, %v239
  %269 = vst.msk [vmem:[%s3 + $0x50] sm:$0xff] %vm80, %v242
  %270 = vst.msk [vmem:[%s3 + $0x58] sm:$0xff] %vm80, %v245
  %271 = vst.msk [vmem:[%s3 + $0x60] sm:$0xff] %vm80, %v248
  %272 = vst.msk [vmem:[%s3 + $0x68] sm:$0xff] %vm80, %v251
  %273 = vst.msk [vmem:[%s3 + $0x70] sm:$0xff] %vm80, %v254
  %274 = vst.msk [vmem:[%s3 + $0x78] sm:$0xff] %vm80, %v257
  // Predicated region
  $region14: #{network_block_forward.5} parent=0 // pred_check
    _
  $region15: #{network_block_forward.5} parent=0 // pred_check_branch
    %276 = sbr.rel (0) target = $region17
  $region16: #{network_block_forward.5} parent=0 // pred_region
    _
  $region17: #{network_block_forward.5} parent=0 // pred_fallthru
    _
  // Predicated region
  $region18: #{network_block_forward.5} parent=0 // pred_check
    _
  $region19: #{network_block_forward.5} parent=0 // pred_check_branch
    %278 = sbr.rel (0) target = $region21
  $region20: #{network_block_forward.5} parent=0 // pred_region
    _
  $region21: #{network_block_forward.5} parent=0 // pred_fallthru
    _

// kernel: network_block_forward.6
$region0: #{network_block_forward.6}
  #allocation0 [shape = 'u32[]', space=smem, size = 0x4, offset = 0x4, fixed_abs, tag = 'smem constant byte address 0x4 - core index']
  #allocation1 [shape = 'u32[72,128]{1,0:T(1,128)}', space=vmem, size = 0x9000, scoped, tag = 'internal scratch']
  %s0 = inlined_call_operand.vmem [shape: f32[128,144], index: 0, kind: input, shape index: {}]
  %s1 = inlined_call_operand.vmem [shape: f32[144,16], index: 1, kind: input, shape index: {}]
  %s2 = inlined_call_operand.vmem [shape: f32[1,16], index: 2, kind: input, shape index: {}]
  %s3 = inlined_call_operand.vmem [shape: f32[128,16], index: 3, kind: output, shape index: {}]
  %s4 = sld [smem:[#allocation0]]
  $region22: #{network_block_forward.6} parent=0
    _
  %s6 = ssub.s32 1, %s4
  %s7 = scalar_select 0, %s6, %s4
  // Predicated region
  $region2: #{network_block_forward.6} parent=0 // pred_check
    _
  $region3: #{network_block_forward.6} parent=0 // pred_check_branch
    %9 = sbr.rel (0) target = $region5
  $region4: #{network_block_forward.6} parent=0 // pred_region
    _
  $region5: #{network_block_forward.6} parent=0 // pred_fallthru
    _
  // Predicated region
  $region6: #{network_block_forward.6} parent=0 // pred_check
    _
  $region7: #{network_block_forward.6} parent=0 // pred_check_branch
    %11 = sbr.rel (0) target = $region9
  $region8: #{network_block_forward.6} parent=0 // pred_region
    _
  $region9: #{network_block_forward.6} parent=0 // pred_fallthru
    _
  // Predicated region
  $region10: #{network_block_forward.6} parent=0 // pred_check
    _
  $region11: #{network_block_forward.6} parent=0 // pred_check_branch
    %13 = sbr.rel (0) target = $region13
  $region12: #{network_block_forward.6} parent=0 // pred_region
    _
  $region13: #{network_block_forward.6} parent=0 // pred_fallthru
    _
  %v14 = vld [vmem:[%s0] sm:$0xff]
  %v15 = vld [vmem:[%s0 + $0x8] sm:$0xff]
  %v16 = vld [vmem:[%s0 + $0x10] sm:$0xff]
  %v17 = vld [vmem:[%s0 + $0x18] sm:$0xff]
  %v18 = vld [vmem:[%s0 + $0x20] sm:$0xff]
  %v19 = vld [vmem:[%s0 + $0x28] sm:$0xff]
  %v20 = vld [vmem:[%s0 + $0x30] sm:$0xff]
  %v21 = vld [vmem:[%s0 + $0x38] sm:$0xff]
  %v22 = vld [vmem:[%s0 + $0x40] sm:$0xff]
  %v23 = vld [vmem:[%s0 + $0x48] sm:$0xff]
  %v24 = vld [vmem:[%s0 + $0x50] sm:$0xff]
  %v25 = vld [vmem:[%s0 + $0x58] sm:$0xff]
  %v26 = vld [vmem:[%s0 + $0x60] sm:$0xff]
  %v27 = vld [vmem:[%s0 + $0x68] sm:$0xff]
  %v28 = vld [vmem:[%s0 + $0x70] sm:$0xff]
  %v29 = vld [vmem:[%s0 + $0x78] sm:$0xff]
  %v30 = vld [vmem:[%s0 + $0x80] sm:$0xff]
  %v31 = vld [vmem:[%s0 + $0x88] sm:$0xff]
  %v32 = vld [vmem:[%s0 + $0x90] sm:$0xff]
  %v33 = vld [vmem:[%s0 + $0x98] sm:$0xff]
  %v34 = vld [vmem:[%s0 + $0xa0] sm:$0xff]
  %v35 = vld [vmem:[%s0 + $0xa8] sm:$0xff]
  %v36 = vld [vmem:[%s0 + $0xb0] sm:$0xff]
  %v37 = vld [vmem:[%s0 + $0xb8] sm:$0xff]
  %v38 = vld [vmem:[%s0 + $0xc0] sm:$0xff]
  %v39 = vld [vmem:[%s0 + $0xc8] sm:$0xff]
  %v40 = vld [vmem:[%s0 + $0xd0] sm:$0xff]
  %v41 = vld [vmem:[%s0 + $0xd8] sm:$0xff]
  %v42 = vld [vmem:[%s0 + $0xe0] sm:$0xff]
  %v43 = vld [vmem:[%s0 + $0xe8] sm:$0xff]
  %v44 = vld [vmem:[%s0 + $0xf0] sm:$0xff]
  %v45 = vld [vmem:[%s0 + $0xf8] sm:$0xff]
  %v46 = vld [vmem:[%s1] sm:$0xff]
  %v47 = vld [vmem:[%s1 + $0x8] sm:$0xff]
  %v48 = vld [vmem:[%s1 + $0x10] sm:$0xff]
  %v49 = vld [vmem:[%s1 + $0x18] sm:$0xff]
  %v50 = vld [vmem:[%s1 + $0x20] sm:$0xff]
  %v51 = vld [vmem:[%s1 + $0x28] sm:$0xff]
  %v52 = vld [vmem:[%s1 + $0x30] sm:$0xff]
  %v53 = vld [vmem:[%s1 + $0x38] sm:$0xff]
  %v54 = vld [vmem:[%s1 + $0x40] sm:$0xff]
  %v55 = vld [vmem:[%s1 + $0x48] sm:$0xff]
  %v56 = vld [vmem:[%s1 + $0x50] sm:$0xff]
  %v57 = vld [vmem:[%s1 + $0x58] sm:$0xff]
  %v58 = vld [vmem:[%s1 + $0x60] sm:$0xff]
  %v59 = vld [vmem:[%s1 + $0x68] sm:$0xff]
  %v60 = vld [vmem:[%s1 + $0x70] sm:$0xff]
  %v61 = vld [vmem:[%s1 + $0x78] sm:$0xff]
  %v62 = vld [vmem:[%s1 + $0x80] sm:$0xff]
  %v63 = vld [vmem:[%s1 + $0x88] sm:$0xff]
  %v64 = vld [vmem:[%s2] sm:$0x1]
  %v66 = vperm.slane %v64, 0
  %vm68 = vcmask 130048
  %v70 = vsel %vm68, %v15, 0
  %v73 = vsel %vm68, %v17, 0
  %v76 = vsel %vm68, %v19, 0
  %v79 = vsel %vm68, %v21, 0
  %v82 = vsel %vm68, %v23, 0
  %v85 = vsel %vm68, %v25, 0
  %v88 = vsel %vm68, %v27, 0
  %v91 = vsel %vm68, %v29, 0
  %v94 = vsel %vm68, %v31, 0
  %v97 = vsel %vm68, %v33, 0
  %v100 = vsel %vm68, %v35, 0
  %v103 = vsel %vm68, %v37, 0
  %v106 = vsel %vm68, %v39, 0
  %v109 = vsel %vm68, %v41, 0
  %v112 = vsel %vm68, %v43, 0
  %v115 = vsel %vm68, %v45, 0
  %117 = vmatpush.msra.mxu0 %v61
  %118 = vmatpush.msra.mxu0 %v60
  %119 = vmatpush.msra.mxu0 %v59
  %120 = vmatpush.msra.mxu0 %v58
  %121 = vmatpush.msra.mxu0 %v57
  %122 = vmatpush.msra.mxu0 %v56
  %123 = vmatpush.msra.mxu0 %v55
  %124 = vmatpush.msra.mxu0 %v54
  %125 = vmatpush.msra.mxu0 %v53
  %126 = vmatpush.msra.mxu0 %v52
  %127 = vmatpush.msra.mxu0 %v51
  %128 = vmatpush.msra.mxu0 %v50
  %129 = vmatpush.msra.mxu0 %v49
  %130 = vmatpush.msra.mxu0 %v48
  %131 = vmatpush.msra.mxu0 %v47
  %132 = vmatpush.msra.mxu0 %v46
  %133 = vmatmul.f32.gmra.mxu0 %v14
  %v134 = vpop.f32.mrf.mxu0
  %v135 = vadd.f32 %v66, %v134
  %136 = vmatmul.f32.gmra.mxu0 %v16
  %v137 = vpop.f32.mrf.mxu0
  %v138 = vadd.f32 %v66, %v137
  %139 = vmatmul.f32.gmra.mxu0 %v18
  %v140 = vpop.f32.mrf.mxu0
  %v141 = vadd.f32 %v66, %v140
  %142 = vmatmul.f32.gmra.mxu0 %v20
  %v143 = vpop.f32.mrf.mxu0
  %v144 = vadd.f32 %v66, %v143
  %145 = vmatmul.f32.gmra.mxu0 %v22
  %v146 = vpop.f32.mrf.mxu0
  %v147 = vadd.f32 %v66, %v146
  %148 = vmatmul.f32.gmra.mxu0 %v24
  %v149 = vpop.f32.mrf.mxu0
  %v150 = vadd.f32 %v66, %v149
  %151 = vmatmul.f32.gmra.mxu0 %v26
  %v152 = vpop.f32.mrf.mxu0
  %v153 = vadd.f32 %v66, %v152
  %154 = vmatmul.f32.gmra.mxu0 %v28
  %v155 = vpop.f32.mrf.mxu0
  %v156 = vadd.f32 %v66, %v155
  %157 = vmatmul.f32.gmra.mxu0 %v30
  %v158 = vpop.f32.mrf.mxu0
  %v159 = vadd.f32 %v66, %v158
  %160 = vmatmul.f32.gmra.mxu0 %v32
  %v161 = vpop.f32.mrf.mxu0
  %v162 = vadd.f32 %v66, %v161
  %163 = vmatmul.f32.gmra.mxu0 %v34
  %v164 = vpop.f32.mrf.mxu0
  %v165 = vadd.f32 %v66, %v164
  %166 = vmatmul.f32.gmra.mxu0 %v36
  %v167 = vpop.f32.mrf.mxu0
  %v168 = vadd.f32 %v66, %v167
  %169 = vmatmul.f32.gmra.mxu0 %v38
  %v170 = vpop.f32.mrf.mxu0
  %v171 = vadd.f32 %v66, %v170
  %172 = vmatmul.f32.gmra.mxu0 %v40
  %v173 = vpop.f32.mrf.mxu0
  %v174 = vadd.f32 %v66, %v173
  %175 = vmatmul.f32.gmra.mxu0 %v42
  %v176 = vpop.f32.mrf.mxu0
  %v177 = vadd.f32 %v66, %v176
  %178 = vmatmul.f32.gmra.mxu0 %v44
  %v179 = vpop.f32.mrf.mxu0
  %v180 = vadd.f32 %v66, %v179
  %181 = vdwg.mxu0
  %182 = vmatpush.msra.mxu0 0.0
  %183 = vmatpush.msra.mxu0 0.0
  %184 = vmatpush.msra.mxu0 0.0
  %185 = vmatpush.msra.mxu0 0.0
  %186 = vmatpush.msra.mxu0 0.0
  %187 = vmatpush.msra.mxu0 0.0
  %188 = vmatpush.msra.mxu0 0.0
  %189 = vmatpush.msra.mxu0 0.0
  %190 = vmatpush.msra.mxu0 0.0
  %191 = vmatpush.msra.mxu0 0.0
  %192 = vmatpush.msra.mxu0 0.0
  %193 = vmatpush.msra.mxu0 0.0
  %194 = vmatpush.msra.mxu0 0.0
  %195 = vmatpush.msra.mxu0 0.0
  %196 = vmatpush.msra.mxu0 %v63
  %197 = vmatpush.msra.mxu0 %v62
  %198 = vmatmul.f32.gmra.mxu0 %v70
  %v199 = vpop.f32.mrf.mxu0
  %v200 = vadd.f32 %v135, %v199
  %201 = vmatmul.f32.gmra.mxu0 %v73
  %v202 = vpop.f32.mrf.mxu0
  %v203 = vadd.f32 %v138, %v202
  %204 = vmatmul.f32.gmra.mxu0 %v76
  %v205 = vpop.f32.mrf.mxu0
  %v206 = vadd.f32 %v141, %v205
  %207 = vmatmul.f32.gmra.mxu0 %v79
  %v208 = vpop.f32.mrf.mxu0
  %v209 = vadd.f32 %v144, %v208
  %210 = vmatmul.f32.gmra.mxu0 %v82
  %v211 = vpop.f32.mrf.mxu0
  %v212 = vadd.f32 %v147, %v211
  %213 = vmatmul.f32.gmra.mxu0 %v85
  %v214 = vpop.f32.mrf.mxu0
  %v215 = vadd.f32 %v150, %v214
  %216 = vmatmul.f32.gmra.mxu0 %v88
  %v217 = vpop.f32.mrf.mxu0
  %v218 = vadd.f32 %v153, %v217
  %219 = vmatmul.f32.gmra.mxu0 %v91
  %v220 = vpop.f32.mrf.mxu0
  %v221 = vadd.f32 %v156, %v220
  %222 = vmatmul.f32.gmra.mxu0 %v94
  %v223 = vpop.f32.mrf.mxu0
  %v224 = vadd.f32 %v159, %v223
  %225 = vmatmul.f32.gmra.mxu0 %v97
  %v226 = vpop.f32.mrf.mxu0
  %v227 = vadd.f32 %v162, %v226
  %228 = vmatmul.f32.gmra.mxu0 %v100
  %v229 = vpop.f32.mrf.mxu0
  %v230 = vadd.f32 %v165, %v229
  %231 = vmatmul.f32.gmra.mxu0 %v103
  %v232 = vpop.f32.mrf.mxu0
  %v233 = vadd.f32 %v168, %v232
  %234 = vmatmul.f32.gmra.mxu0 %v106
  %v235 = vpop.f32.mrf.mxu0
  %v236 = vadd.f32 %v171, %v235
  %237 = vmatmul.f32.gmra.mxu0 %v109
  %v238 = vpop.f32.mrf.mxu0
  %v239 = vadd.f32 %v174, %v238
  %240 = vmatmul.f32.gmra.mxu0 %v112
  %v241 = vpop.f32.mrf.mxu0
  %v242 = vadd.f32 %v177, %v241
  %243 = vmatmul.f32.gmra.mxu0 %v115
  %v244 = vpop.f32.mrf.mxu0
  %v245 = vadd.f32 %v180, %v244
  %246 = vdwg.mxu0
  %vm247 = vcmp.gt.f32.partialorder %v200, 0.0
  %vm248 = vcmp.gt.f32.partialorder %v203, 0.0
  %vm249 = vcmp.gt.f32.partialorder %v206, 0.0
  %vm250 = vcmp.gt.f32.partialorder %v209, 0.0
  %vm251 = vcmp.gt.f32.partialorder %v212, 0.0
  %vm252 = vcmp.gt.f32.partialorder %v215, 0.0
  %vm253 = vcmp.gt.f32.partialorder %v218, 0.0
  %vm254 = vcmp.gt.f32.partialorder %v221, 0.0
  %vm255 = vcmp.gt.f32.partialorder %v224, 0.0
  %vm256 = vcmp.gt.f32.partialorder %v227, 0.0
  %vm257 = vcmp.gt.f32.partialorder %v230, 0.0
  %vm258 = vcmp.gt.f32.partialorder %v233, 0.0
  %vm259 = vcmp.gt.f32.partialorder %v236, 0.0
  %vm260 = vcmp.gt.f32.partialorder %v239, 0.0
  %vm261 = vcmp.gt.f32.partialorder %v242, 0.0
  %vm262 = vcmp.gt.f32.partialorder %v245, 0.0
  %v263 = vmul.f32 %v200, 0.1
  %v264 = vmul.f32 %v203, 0.1
  %v265 = vmul.f32 %v206, 0.1
  %v266 = vmul.f32 %v209, 0.1
  %v267 = vmul.f32 %v212, 0.1
  %v268 = vmul.f32 %v215, 0.1
  %v269 = vmul.f32 %v218, 0.1
  %v270 = vmul.f32 %v221, 0.1
  %v271 = vmul.f32 %v224, 0.1
  %v272 = vmul.f32 %v227, 0.1
  %v273 = vmul.f32 %v230, 0.1
  %v274 = vmul.f32 %v233, 0.1
  %v275 = vmul.f32 %v236, 0.1
  %v276 = vmul.f32 %v239, 0.1
  %v277 = vmul.f32 %v242, 0.1
  %v278 = vmul.f32 %v245, 0.1
  %v279 = vsel %vm247, %v200, %v263
  %v280 = vsel %vm248, %v203, %v264
  %v281 = vsel %vm249, %v206, %v265
  %v282 = vsel %vm250, %v209, %v266
  %v283 = vsel %vm251, %v212, %v267
  %v284 = vsel %vm252, %v215, %v268
  %v285 = vsel %vm253, %v218, %v269
  %v286 = vsel %vm254, %v221, %v270
  %v287 = vsel %vm255, %v224, %v271
  %v288 = vsel %vm256, %v227, %v272
  %v289 = vsel %vm257, %v230, %v273
  %v290 = vsel %vm258, %v233, %v274
  %v291 = vsel %vm259, %v236, %v275
  %v292 = vsel %vm260, %v239, %v276
  %v293 = vsel %vm261, %v242, %v277
  %v294 = vsel %vm262, %v245, %v278
  %295 = vst.msk [vmem:[%s3] sm:$0xff] %vm68, %v279
  %296 = vst.msk [vmem:[%s3 + $0x8] sm:$0xff] %vm68, %v280
  %297 = vst.msk [vmem:[%s3 + $0x10] sm:$0xff] %vm68, %v281
  %298 = vst.msk [vmem:[%s3 + $0x18] sm:$0xff] %vm68, %v282
  %299 = vst.msk [vmem:[%s3 + $0x20] sm:$0xff] %vm68, %v283
  %300 = vst.msk [vmem:[%s3 + $0x28] sm:$0xff] %vm68, %v284
  %301 = vst.msk [vmem:[%s3 + $0x30] sm:$0xff] %vm68, %v285
  %302 = vst.msk [vmem:[%s3 + $0x38] sm:$0xff] %vm68, %v286
  %303 = vst.msk [vmem:[%s3 + $0x40] sm:$0xff] %vm68, %v287
  %304 = vst.msk [vmem:[%s3 + $0x48] sm:$0xff] %vm68, %v288
  %305 = vst.msk [vmem:[%s3 + $0x50] sm:$0xff] %vm68, %v289
  %306 = vst.msk [vmem:[%s3 + $0x58] sm:$0xff] %vm68, %v290
  %307 = vst.msk [vmem:[%s3 + $0x60] sm:$0xff] %vm68, %v291
  %308 = vst.msk [vmem:[%s3 + $0x68] sm:$0xff] %vm68, %v292
  %309 = vst.msk [vmem:[%s3 + $0x70] sm:$0xff] %vm68, %v293
  %310 = vst.msk [vmem:[%s3 + $0x78] sm:$0xff] %vm68, %v294
  // Predicated region
  $region14: #{network_block_forward.6} parent=0 // pred_check
    _
  $region15: #{network_block_forward.6} parent=0 // pred_check_branch
    %312 = sbr.rel (0) target = $region17
  $region16: #{network_block_forward.6} parent=0 // pred_region
    _
  $region17: #{network_block_forward.6} parent=0 // pred_fallthru
    _
  // Predicated region
  $region18: #{network_block_forward.6} parent=0 // pred_check
    _
  $region19: #{network_block_forward.6} parent=0 // pred_check_branch
    %314 = sbr.rel (0) target = $region21
  $region20: #{network_block_forward.6} parent=0 // pred_region
    _
  $region21: #{network_block_forward.6} parent=0 // pred_fallthru
    _

// kernel: network_block_forward.7
$region0: #{network_block_forward.7}
  #allocation0 [shape = 'u32[]', space=smem, size = 0x4, offset = 0x4, fixed_abs, tag = 'smem constant byte address 0x4 - core index']
  #allocation1 [shape = 'u32[72,128]{1,0:T(1,128)}', space=vmem, size = 0x9000, scoped, tag = 'internal scratch']
  %s0 = inlined_call_operand.vmem [shape: f32[128,144], index: 0, kind: input, shape index: {}]
  %s1 = inlined_call_operand.vmem [shape: f32[144,16], index: 1, kind: input, shape index: {}]
  %s2 = inlined_call_operand.vmem [shape: f32[128,16], index: 2, kind: input, shape index: {}]
  %s3 = inlined_call_operand.hbm [shape: f32[128,16], index: 3, kind: output, shape index: {}]
  %s4 = sld [smem:[#allocation0]]
  $region22: #{network_block_forward.7} parent=0
    _
  %s6 = ssub.s32 1, %s4
  %s7 = scalar_select 0, %s6, %s4
  $region1: #{network_block_forward.7} parent=0
    #allocation2 [shape = 'u8[65536]{0}', space=vmem, size = 0x10000, scoped, tag = 'output window, operand 0, single buffered']
    #allocation3 [shape = 's32[1]{0}', space=sflag, size = 0x4, scoped, tag = 'scoped memory for network_block_forward.7']
    %8 = vsyncpa [#allocation3], 0
    // Predicated region
    $region2: #{network_block_forward.7} parent=1 // pred_check
      _
    $region3: #{network_block_forward.7} parent=1 // pred_check_branch
      %10 = sbr.rel (0) target = $region5
    $region4: #{network_block_forward.7} parent=1 // pred_region
      _
    $region5: #{network_block_forward.7} parent=1 // pred_fallthru
      _
    // Predicated region
    $region6: #{network_block_forward.7} parent=1 // pred_check
      _
    $region7: #{network_block_forward.7} parent=1 // pred_check_branch
      %12 = sbr.rel (0) target = $region9
    $region8: #{network_block_forward.7} parent=1 // pred_region
      _
    $region9: #{network_block_forward.7} parent=1 // pred_fallthru
      _
    // Predicated region
    $region10: #{network_block_forward.7} parent=1 // pred_check
      _
    $region11: #{network_block_forward.7} parent=1 // pred_check_branch
      %14 = sbr.rel (0) target = $region13
    $region12: #{network_block_forward.7} parent=1 // pred_region
      _
    $region13: #{network_block_forward.7} parent=1 // pred_fallthru
      _
    %v15 = vld [vmem:[%s0] sm:$0xff]
    %v16 = vld [vmem:[%s0 + $0x8] sm:$0xff]
    %v17 = vld [vmem:[%s0 + $0x10] sm:$0xff]
    %v18 = vld [vmem:[%s0 + $0x18] sm:$0xff]
    %v19 = vld [vmem:[%s0 + $0x20] sm:$0xff]
    %v20 = vld [vmem:[%s0 + $0x28] sm:$0xff]
    %v21 = vld [vmem:[%s0 + $0x30] sm:$0xff]
    %v22 = vld [vmem:[%s0 + $0x38] sm:$0xff]
    %v23 = vld [vmem:[%s0 + $0x40] sm:$0xff]
    %v24 = vld [vmem:[%s0 + $0x48] sm:$0xff]
    %v25 = vld [vmem:[%s0 + $0x50] sm:$0xff]
    %v26 = vld [vmem:[%s0 + $0x58] sm:$0xff]
    %v27 = vld [vmem:[%s0 + $0x60] sm:$0xff]
    %v28 = vld [vmem:[%s0 + $0x68] sm:$0xff]
    %v29 = vld [vmem:[%s0 + $0x70] sm:$0xff]
    %v30 = vld [vmem:[%s0 + $0x78] sm:$0xff]
    %v31 = vld [vmem:[%s0 + $0x80] sm:$0xff]
    %v32 = vld [vmem:[%s0 + $0x88] sm:$0xff]
    %v33 = vld [vmem:[%s0 + $0x90] sm:$0xff]
    %v34 = vld [vmem:[%s0 + $0x98] sm:$0xff]
    %v35 = vld [vmem:[%s0 + $0xa0] sm:$0xff]
    %v36 = vld [vmem:[%s0 + $0xa8] sm:$0xff]
    %v37 = vld [vmem:[%s0 + $0xb0] sm:$0xff]
    %v38 = vld [vmem:[%s0 + $0xb8] sm:$0xff]
    %v39 = vld [vmem:[%s0 + $0xc0] sm:$0xff]
    %v40 = vld [vmem:[%s0 + $0xc8] sm:$0xff]
    %v41 = vld [vmem:[%s0 + $0xd0] sm:$0xff]
    %v42 = vld [vmem:[%s0 + $0xd8] sm:$0xff]
    %v43 = vld [vmem:[%s0 + $0xe0] sm:$0xff]
    %v44 = vld [vmem:[%s0 + $0xe8] sm:$0xff]
    %v45 = vld [vmem:[%s0 + $0xf0] sm:$0xff]
    %v46 = vld [vmem:[%s0 + $0xf8] sm:$0xff]
    %v47 = vld [vmem:[%s1] sm:$0xff]
    %v48 = vld [vmem:[%s1 + $0x8] sm:$0xff]
    %v49 = vld [vmem:[%s1 + $0x10] sm:$0xff]
    %v50 = vld [vmem:[%s1 + $0x18] sm:$0xff]
    %v51 = vld [vmem:[%s1 + $0x20] sm:$0xff]
    %v52 = vld [vmem:[%s1 + $0x28] sm:$0xff]
    %v53 = vld [vmem:[%s1 + $0x30] sm:$0xff]
    %v54 = vld [vmem:[%s1 + $0x38] sm:$0xff]
    %v55 = vld [vmem:[%s1 + $0x40] sm:$0xff]
    %v56 = vld [vmem:[%s1 + $0x48] sm:$0xff]
    %v57 = vld [vmem:[%s1 + $0x50] sm:$0xff]
    %v58 = vld [vmem:[%s1 + $0x58] sm:$0xff]
    %v59 = vld [vmem:[%s1 + $0x60] sm:$0xff]
    %v60 = vld [vmem:[%s1 + $0x68] sm:$0xff]
    %v61 = vld [vmem:[%s1 + $0x70] sm:$0xff]
    %v62 = vld [vmem:[%s1 + $0x78] sm:$0xff]
    %v63 = vld [vmem:[%s1 + $0x80] sm:$0xff]
    %v64 = vld [vmem:[%s1 + $0x88] sm:$0xff]
    %v65 = vld [vmem:[%s2] sm:$0xff]
    %v66 = vld [vmem:[%s2 + $0x8] sm:$0xff]
    %v67 = vld [vmem:[%s2 + $0x10] sm:$0xff]
    %v68 = vld [vmem:[%s2 + $0x18] sm:$0xff]
    %v69 = vld [vmem:[%s2 + $0x20] sm:$0xff]
    %v70 = vld [vmem:[%s2 + $0x28] sm:$0xff]
    %v71 = vld [vmem:[%s2 + $0x30] sm:$0xff]
    %v72 = vld [vmem:[%s2 + $0x38] sm:$0xff]
    %v73 = vld [vmem:[%s2 + $0x40] sm:$0xff]
    %v74 = vld [vmem:[%s2 + $0x48] sm:$0xff]
    %v75 = vld [vmem:[%s2 + $0x50] sm:$0xff]
    %v76 = vld [vmem:[%s2 + $0x58] sm:$0xff]
    %v77 = vld [vmem:[%s2 + $0x60] sm:$0xff]
    %v78 = vld [vmem:[%s2 + $0x68] sm:$0xff]
    %v79 = vld [vmem:[%s2 + $0x70] sm:$0xff]
    %v80 = vld [vmem:[%s2 + $0x78] sm:$0xff]
    %vm81 = vcmask 130048
    %v83 = vsel %vm81, %v16, 0
    %v86 = vsel %vm81, %v18, 0
    %v89 = vsel %vm81, %v20, 0
    %v92 = vsel %vm81, %v22, 0
    %v95 = vsel %vm81, %v24, 0
    %v98 = vsel %vm81, %v26, 0
    %v101 = vsel %vm81, %v28, 0
    %v104 = vsel %vm81, %v30, 0
    %v107 = vsel %vm81, %v32, 0
    %v110 = vsel %vm81, %v34, 0
    %v113 = vsel %vm81, %v36, 0
    %v116 = vsel %vm81, %v38, 0
    %v119 = vsel %vm81, %v40, 0
    %v122 = vsel %vm81, %v42, 0
    %v125 = vsel %vm81, %v44, 0
    %v128 = vsel %vm81, %v46, 0
    %130 = vmatpush.msra.mxu0 %v62
    %131 = vmatpush.msra.mxu0 %v61
    %132 = vmatpush.msra.mxu0 %v60
    %133 = vmatpush.msra.mxu0 %v59
    %134 = vmatpush.msra.mxu0 %v58
    %135 = vmatpush.msra.mxu0 %v57
    %136 = vmatpush.msra.mxu0 %v56
    %137 = vmatpush.msra.mxu0 %v55
    %138 = vmatpush.msra.mxu0 %v54
    %139 = vmatpush.msra.mxu0 %v53
    %140 = vmatpush.msra.mxu0 %v52
    %141 = vmatpush.msra.mxu0 %v51
    %142 = vmatpush.msra.mxu0 %v50
    %143 = vmatpush.msra.mxu0 %v49
    %144 = vmatpush.msra.mxu0 %v48
    %145 = vmatpush.msra.mxu0 %v47
    %146 = vmatmul.f32.gmra.mxu0 %v15
    %v147 = vpop.f32.mrf.mxu0
    %v148 = vadd.f32 %v65, %v147
    %149 = vmatmul.f32.gmra.mxu0 %v17
    %v150 = vpop.f32.mrf.mxu0
    %v151 = vadd.f32 %v66, %v150
    %152 = vmatmul.f32.gmra.mxu0 %v19
    %v153 = vpop.f32.mrf.mxu0
    %v154 = vadd.f32 %v67, %v153
    %155 = vmatmul.f32.gmra.mxu0 %v21
    %v156 = vpop.f32.mrf.mxu0
    %v157 = vadd.f32 %v68, %v156
    %158 = vmatmul.f32.gmra.mxu0 %v23
    %v159 = vpop.f32.mrf.mxu0
    %v160 = vadd.f32 %v69, %v159
    %161 = vmatmul.f32.gmra.mxu0 %v25
    %v162 = vpop.f32.mrf.mxu0
    %v163 = vadd.f32 %v70, %v162
    %164 = vmatmul.f32.gmra.mxu0 %v27
    %v165 = vpop.f32.mrf.mxu0
    %v166 = vadd.f32 %v71, %v165
    %167 = vmatmul.f32.gmra.mxu0 %v29
    %v168 = vpop.f32.mrf.mxu0
    %v169 = vadd.f32 %v72, %v168
    %170 = vmatmul.f32.gmra.mxu0 %v31
    %v171 = vpop.f32.mrf.mxu0
    %v172 = vadd.f32 %v73, %v171
    %173 = vmatmul.f32.gmra.mxu0 %v33
    %v174 = vpop.f32.mrf.mxu0
    %v175 = vadd.f32 %v74, %v174
    %176 = vmatmul.f32.gmra.mxu0 %v35
    %v177 = vpop.f32.mrf.mxu0
    %v178 = vadd.f32 %v75, %v177
    %179 = vmatmul.f32.gmra.mxu0 %v37
    %v180 = vpop.f32.mrf.mxu0
    %v181 = vadd.f32 %v76, %v180
    %182 = vmatmul.f32.gmra.mxu0 %v39
    %v183 = vpop.f32.mrf.mxu0
    %v184 = vadd.f32 %v77, %v183
    %185 = vmatmul.f32.gmra.mxu0 %v41
    %v186 = vpop.f32.mrf.mxu0
    %v187 = vadd.f32 %v78, %v186
    %188 = vmatmul.f32.gmra.mxu0 %v43
    %v189 = vpop.f32.mrf.mxu0
    %v190 = vadd.f32 %v79, %v189
    %191 = vmatmul.f32.gmra.mxu0 %v45
    %v192 = vpop.f32.mrf.mxu0
    %v193 = vadd.f32 %v80, %v192
    %194 = vdwg.mxu0
    %195 = vmatpush.msra.mxu0 0.0
    %196 = vmatpush.msra.mxu0 0.0
    %197 = vmatpush.msra.mxu0 0.0
    %198 = vmatpush.msra.mxu0 0.0
    %199 = vmatpush.msra.mxu0 0.0
    %200 = vmatpush.msra.mxu0 0.0
    %201 = vmatpush.msra.mxu0 0.0
    %202 = vmatpush.msra.mxu0 0.0
    %203 = vmatpush.msra.mxu0 0.0
    %204 = vmatpush.msra.mxu0 0.0
    %205 = vmatpush.msra.mxu0 0.0
    %206 = vmatpush.msra.mxu0 0.0
    %207 = vmatpush.msra.mxu0 0.0
    %208 = vmatpush.msra.mxu0 0.0
    %209 = vmatpush.msra.mxu0 %v64
    %210 = vmatpush.msra.mxu0 %v63
    %211 = vmatmul.f32.gmra.mxu0 %v83
    %v212 = vpop.f32.mrf.mxu0
    %v213 = vadd.f32 %v148, %v212
    %214 = vmatmul.f32.gmra.mxu0 %v86
    %v215 = vpop.f32.mrf.mxu0
    %v216 = vadd.f32 %v151, %v215
    %217 = vmatmul.f32.gmra.mxu0 %v89
    %v218 = vpop.f32.mrf.mxu0
    %v219 = vadd.f32 %v154, %v218
    %220 = vmatmul.f32.gmra.mxu0 %v92
    %v221 = vpop.f32.mrf.mxu0
    %v222 = vadd.f32 %v157, %v221
    %223 = vmatmul.f32.gmra.mxu0 %v95
    %v224 = vpop.f32.mrf.mxu0
    %v225 = vadd.f32 %v160, %v224
    %226 = vmatmul.f32.gmra.mxu0 %v98
    %v227 = vpop.f32.mrf.mxu0
    %v228 = vadd.f32 %v163, %v227
    %229 = vmatmul.f32.gmra.mxu0 %v101
    %v230 = vpop.f32.mrf.mxu0
    %v231 = vadd.f32 %v166, %v230
    %232 = vmatmul.f32.gmra.mxu0 %v104
    %v233 = vpop.f32.mrf.mxu0
    %v234 = vadd.f32 %v169, %v233
    %235 = vmatmul.f32.gmra.mxu0 %v107
    %v236 = vpop.f32.mrf.mxu0
    %v237 = vadd.f32 %v172, %v236
    %238 = vmatmul.f32.gmra.mxu0 %v110
    %v239 = vpop.f32.mrf.mxu0
    %v240 = vadd.f32 %v175, %v239
    %241 = vmatmul.f32.gmra.mxu0 %v113
    %v242 = vpop.f32.mrf.mxu0
    %v243 = vadd.f32 %v178, %v242
    %244 = vmatmul.f32.gmra.mxu0 %v116
    %v245 = vpop.f32.mrf.mxu0
    %v246 = vadd.f32 %v181, %v245
    %247 = vmatmul.f32.gmra.mxu0 %v119
    %v248 = vpop.f32.mrf.mxu0
    %v249 = vadd.f32 %v184, %v248
    %250 = vmatmul.f32.gmra.mxu0 %v122
    %v251 = vpop.f32.mrf.mxu0
    %v252 = vadd.f32 %v187, %v251
    %253 = vmatmul.f32.gmra.mxu0 %v125
    %v254 = vpop.f32.mrf.mxu0
    %v255 = vadd.f32 %v190, %v254
    %256 = vmatmul.f32.gmra.mxu0 %v128
    %v257 = vpop.f32.mrf.mxu0
    %v258 = vadd.f32 %v193, %v257
    %259 = vdwg.mxu0
    %260 = vst.msk [vmem:[#allocation2] sm:$0xff] %vm81, %v213
    %261 = vst.msk [vmem:[#allocation2 + $0x8] sm:$0xff] %vm81, %v216
    %262 = vst.msk [vmem:[#allocation2 + $0x10] sm:$0xff] %vm81, %v219
    %263 = vst.msk [vmem:[#allocation2 + $0x18] sm:$0xff] %vm81, %v222
    %264 = vst.msk [vmem:[#allocation2 + $0x20] sm:$0xff] %vm81, %v225
    %265 = vst.msk [vmem:[#allocation2 + $0x28] sm:$0xff] %vm81, %v228
    %266 = vst.msk [vmem:[#allocation2 + $0x30] sm:$0xff] %vm81, %v231
    %267 = vst.msk [vmem:[#allocation2 + $0x38] sm:$0xff] %vm81, %v234
    %268 = vst.msk [vmem:[#allocation2 + $0x40] sm:$0xff] %vm81, %v237
    %269 = vst.msk [vmem:[#allocation2 + $0x48] sm:$0xff] %vm81, %v240
    %270 = vst.msk [vmem:[#allocation2 + $0x50] sm:$0xff] %vm81, %v243
    %271 = vst.msk [vmem:[#allocation2 + $0x58] sm:$0xff] %vm81, %v246
    %272 = vst.msk [vmem:[#allocation2 + $0x60] sm:$0xff] %vm81, %v249
    %273 = vst.msk [vmem:[#allocation2 + $0x68] sm:$0xff] %vm81, %v252
    %274 = vst.msk [vmem:[#allocation2 + $0x70] sm:$0xff] %vm81, %v255
    %275 = vst.msk [vmem:[#allocation2 + $0x78] sm:$0xff] %vm81, %v258
    // Predicated region
    $region14: #{network_block_forward.7} parent=1 // pred_check
      _
    $region15: #{network_block_forward.7} parent=1 // pred_check_branch
      %277 = sbr.rel (0) target = $region17
    $region16: #{network_block_forward.7} parent=1 // pred_region
      %279 = vsyncadd [#allocation3], 0
      %s280 = sshll.u32 [#allocation2], 4
      %s281 = int_to_ptr.vmem [resolvable:$true] %s280
      %s282 = sshll.u32 %s3, 4
      %s283 = int_to_ptr.hbm [resolvable:$true] %s282
      %288 = dma.vmem_to_hbm [thread:$0]  %s281, 2048, %s283, [#allocation3], 128, 128, 8
    $region17: #{network_block_forward.7} parent=1 // pred_fallthru
      _
    // Predicated region
    $region18: #{network_block_forward.7} parent=1 // pred_check
      _
    $region19: #{network_block_forward.7} parent=1 // pred_check_branch
      %290 = sbr.rel (0) target = $region21
    $region20: #{network_block_forward.7} parent=1 // pred_region
      %292 = dma.done [#allocation3], 2048
    $region21: #{network_block_forward.7} parent=1 // pred_fallthru
      _
    %293 = vsyncpa [#allocation3], 1

</llo_original>
